<compile_context>
chip_gen: v7x
topology: tpu7x:2x2x1
jax: 0.10.0
libtpu: 0.0.40
codegen_flags: <defaults>
</compile_context>

<pallas_src>
import dataclasses
import functools

import jax
import jax.numpy as jnp
from jax.experimental import pallas as pl
from jax.experimental.pallas import tpu as pltpu

_LANE = 128
_TM_CAP = 256
_MIB = 1024 * 1024


def _round_up(x, m):
    return ((x + m - 1) // m) * m


def _hw_config():
    """Generation-aware budgets.  Falls back to the most conservative (v7x) numbers."""
    vmem_cap = None
    try:
        info = pltpu.get_tpu_info()
        vmem_cap = int(getattr(info, "vmem_capacity_bytes", 0)) or None
    except Exception:
        vmem_cap = None
    kind = ""
    try:
        kind = jax.devices()[0].device_kind.lower()
    except Exception:
        pass
    if vmem_cap is None:
        vmem_cap = 128 * _MIB if ("v5" in kind or "v6" in kind) else 64 * _MIB
    old_gen = any(t in kind for t in ("v2", "v3", "v4", "v5"))
    if vmem_cap >= 96 * _MIB:          # v5e / v6e: 128 MiB VMEM per core
        return dict(
            vmem_limit_bytes=64 * _MIB,
            weight_tile_budget=14 * _MIB,
            # ~820 GB/s v5e: double-buffering already hides everything; deeper
            # pipelining just burns VMEM.  3 buffers on v6e (faster HBM).
            weight_buffers=2 if old_gen else 3,
        )
    return dict(                        # v7x: 64 MiB VMEM per TensorCore
        vmem_limit_bytes=40 * _MIB,
        weight_tile_budget=10 * _MIB,
        weight_buffers=2,
    )


@dataclasses.dataclass(frozen=True)
class LinearPlan:
    K: int
    N: int
    Kp: int
    Np: int
    tn: int
    tk: int
    collapse_k: bool
    weight_buffers: int
    vmem_limit_bytes: int


def plan_linear(K, N, *, weight_dtype=jnp.bfloat16, hw=None):
    """Shape-only tiling plan (fixed at init so weights can be pre-padded once)."""
    hw = hw or _hw_config()
    budget = hw["weight_tile_budget"]
    # Plan tile sizes as if the streamed weight were bf16 even when stored int8: the
    # in-kernel dequantized bf16 copy occupies the same VMEM either way, so this keeps
    # the quantized path inside the same VMEM envelope (its win is HBM bytes, not tiles).
    plan_itemsize = max(jnp.dtype(weight_dtype).itemsize, 2)

    # Lane-dense output tile, but always >= 2 N blocks (when N allows) so both v7x
    # TensorCores get work on the 'parallel' N axis even when the M axis is 1 block.
    tn = min(1024, _round_up(N, _LANE))
    while tn > _LANE and _round_up(N, tn) // tn < 2:
        tn //= 2
    Np = _round_up(N, tn)

    k_full = _round_up(K, _LANE)
    if k_full * tn * plan_itemsize <= budget:
        return LinearPlan(K, N, k_full, Np, tn, k_full, True,
                          hw["weight_buffers"], hw["vmem_limit_bytes"])

    # K-tiled: largest lane-aligned tk under the budget that minimises K padding
    # (no artificial 4096 cap -- e.g. tk=6272 / 3584 divide 25088 exactly).
    max_tk = max(_LANE, (budget // (tn * plan_itemsize)) // _LANE * _LANE)
    best_tk, best_key = _LANE, None
    for cand in range(_LANE, max_tk + 1, _LANE):
        key = (_round_up(K, cand) - K, -cand)   # least padding, then biggest tile
        if best_key is None or key < best_key:
            best_tk, best_key = cand, key
    Kp = _round_up(K, best_tk)
    return LinearPlan(K, N, Kp, Np, tn, best_tk, False,
                      hw["weight_buffers"], hw["vmem_limit_bytes"])


@dataclasses.dataclass
class LinearLayer:
    plan: LinearPlan
    w: jax.Array        # (Kp, Np): bf16, or int8 when quantized
    b: jax.Array        # (1, Np) float32
    scale: object       # (1, Np) float32 per-output-channel dequant scale, or None


def prepare_linear(w, b, plan, *, weight_dtype=jnp.bfloat16, quantize=False):
    """Pad / cast / (optionally) int8-quantize a (K, N) weight + (N,) bias ONCE, at init."""
    K, N = w.shape
    assert (K, N) == (plan.K, plan.N), ((K, N), (plan.K, plan.N))
    pad_kn = ((0, plan.Kp - K), (0, plan.Np - N))
    if quantize:
        w32 = w.astype(jnp.float32)
        scale = jnp.maximum(jnp.max(jnp.abs(w32), axis=0) / 127.0, 1e-12)
        wq = jnp.clip(jnp.round(w32 / scale), -127, 127).astype(jnp.int8)
        w_p = jnp.pad(wq, pad_kn)
        s_p = jnp.pad(scale, (0, plan.Np - N)).reshape(1, plan.Np).astype(jnp.float32)
    else:
        w_p = jnp.pad(w.astype(weight_dtype), pad_kn)
        s_p = None
    b_p = jnp.pad(b.astype(jnp.float32), (0, plan.Np - N)).reshape(1, plan.Np)
    return w_p, b_p, s_p


def _weight_spec(block_shape, index_map, buffers):
    """Weight-stream BlockSpec; >2 buffers hide DMA jitter on the streamed operand."""
    if buffers > 2 and hasattr(pl, "Buffered"):
        try:
            return pl.BlockSpec(block_shape, index_map,
                                pipeline_mode=pl.Buffered(buffers))
        except TypeError:   # pipeline_mode kwarg unavailable -> default double-buffer
            pass
    return pl.BlockSpec(block_shape, index_map)


def _linear_flat_kernel(*refs, apply_relu, quantized, dequant_dtype):
    """Whole reduction dim in one block: no accumulator, no k predication."""
    if quantized:
        x_ref, w_ref, s_ref, b_ref, o_ref = refs
        w = w_ref[...].astype(dequant_dtype)       # int8 -> bf16; scale applied post-dot
    else:
        x_ref, w_ref, b_ref, o_ref = refs
        s_ref, w = None, w_ref[...]
    out = jnp.dot(x_ref[...], w, preferred_element_type=jnp.float32)
    if quantized:
        out = out * s_ref[...]
    out = out + b_ref[...]                         # (tm, tn) + (1, tn)
    if apply_relu:
        out = jnp.maximum(out, 0.0)
    o_ref[...] = out.astype(o_ref.dtype)


def _linear_ktiled_kernel(*refs, apply_relu, quantized, dequant_dtype):
    """(tm, tn) output tile, reducing over the last ('arbitrary') grid axis."""
    if quantized:
        x_ref, w_ref, s_ref, b_ref, o_ref, acc_ref = refs
    else:
        x_ref, w_ref, b_ref, o_ref, acc_ref = refs
        s_ref = None
    k = pl.program_id(2)

    @pl.when(k == 0)
    def _():
        acc_ref[...] = jnp.zeros_like(acc_ref)

    w = w_ref[...]
    if quantized:
        w = w.astype(dequant_dtype)
    acc_ref[...] += jnp.dot(x_ref[...], w, preferred_element_type=jnp.float32)

    @pl.when(k == pl.num_programs(2) - 1)
    def _():
        out = acc_ref[...]
        if quantized:
            out = out * s_ref[...]
        out = out + b_ref[...]
        if apply_relu:
            out = jnp.maximum(out, 0.0)
        o_ref[...] = out.astype(o_ref.dtype)


def linear(x, layer, *, relu=False, out_dtype=None, compute_dtype=jnp.bfloat16,
           tm_cap=_TM_CAP):
    """y = x @ W + b (optional ReLU) for a pre-padded LinearLayer.  Any batch M."""
    plan = layer.plan
    M, K = x.shape
    assert K == plan.K, (K, plan.K)
    if out_dtype is None:
        out_dtype = x.dtype
    quantized = layer.scale is not None

    x = x.astype(compute_dtype)
    # bf16 packs 2 rows per sublane -> 16-row granularity avoids half-filled vregs.
    sub = 16 if jnp.dtype(compute_dtype).itemsize == 2 else 8
    tm = max(sub, min(_round_up(M, sub), (tm_cap // sub) * sub))
    Mp = _round_up(M, tm)
    if (Mp, plan.Kp) != (M, K):      # activations are small; weights were pre-padded
        x = jnp.pad(x, ((0, Mp - M), (0, plan.Kp - K)))

    n_m, n_n = Mp // tm, plan.Np // plan.tn
    x_is = jnp.dtype(compute_dtype).itemsize
    w_is = jnp.dtype(layer.w.dtype).itemsize
    o_is = jnp.dtype(out_dtype).itemsize

    inputs = [x, layer.w] + ([layer.scale] if quantized else []) + [layer.b]
    kern_kwargs = dict(apply_relu=relu, quantized=quantized, dequant_dtype=compute_dtype)

    def nvec_specs(index_map):          # (1, tn) streams: [scale,] bias
        return [pl.BlockSpec((1, plan.tn), index_map)
                for _ in range(2 if quantized else 1)]

    if plan.collapse_k:
        kernel = functools.partial(_linear_flat_kernel, **kern_kwargs)
        if n_m > 1:
            # N-outer / M-inner: the (Kp, tn) weight stripe keeps the same block index
            # across the inner M steps, so Pallas streams each stripe from HBM once.
            grid = (n_n, n_m)
            in_specs = ([pl.BlockSpec((tm, plan.Kp), lambda n, m: (m, 0)),
                         pl.BlockSpec((plan.Kp, plan.tn), lambda n, m: (0, n))]
                        + nvec_specs(lambda n, m: (0, n)))
            out_spec = pl.BlockSpec((tm, plan.tn), lambda n, m: (m, n))
            x_bytes, w_bytes = Mp * plan.Kp * x_is * n_n, plan.Kp * plan.Np * w_is
        else:
            grid = (n_m, n_n)
            in_specs = ([pl.BlockSpec((tm, plan.Kp), lambda i, j: (i, 0)),
                         pl.BlockSpec((plan.Kp, plan.tn), lambda i, j: (0, j))]
                        + nvec_specs(lambda i, j: (0, j)))
            out_spec = pl.BlockSpec((tm, plan.tn), lambda i, j: (i, j))
            x_bytes, w_bytes = Mp * plan.Kp * x_is, plan.Kp * plan.Np * w_is
        grid_spec = pltpu.PrefetchScalarGridSpec(
            num_scalar_prefetch=0, grid=grid, in_specs=in_specs, out_specs=out_spec)
        dims = ("parallel", "parallel")
    else:
        n_k = plan.Kp // plan.tk
        bufs = plan.weight_buffers if n_k >= plan.weight_buffers else 2
        kernel = functools.partial(_linear_ktiled_kernel, **kern_kwargs)
        grid = (n_m, n_n, n_k)
        in_specs = ([pl.BlockSpec((tm, plan.tk), lambda i, j, k: (i, k)),
                     _weight_spec((plan.tk, plan.tn), lambda i, j, k: (k, j), bufs)]
                    + nvec_specs(lambda i, j, k: (0, j)))
        grid_spec = pltpu.PrefetchScalarGridSpec(
            num_scalar_prefetch=0, grid=grid, in_specs=in_specs,
            out_specs=pl.BlockSpec((tm, plan.tn), lambda i, j, k: (i, j)),
            scratch_shapes=[pltpu.VMEM((tm, plan.tn), jnp.float32)])
        dims = ("parallel", "parallel", "arbitrary")
        x_bytes, w_bytes = Mp * plan.Kp * x_is * n_n, plan.Kp * plan.Np * w_is * n_m

    vec_bytes = plan.Np * 4 * (2 if quantized else 1) * n_m
    cost = pl.CostEstimate(flops=2 * M * K * plan.N, transcendentals=0,
                           bytes_accessed=x_bytes + w_bytes + vec_bytes
                           + Mp * plan.Np * o_is)

    out = pl.pallas_call(
        kernel,
        out_shape=jax.ShapeDtypeStruct((Mp, plan.Np), out_dtype),
        grid_spec=grid_spec,
        compiler_params=pltpu.CompilerParams(
            dimension_semantics=dims, vmem_limit_bytes=plan.vmem_limit_bytes),
        cost_estimate=cost,
    )(*inputs)

    if (Mp, plan.Np) != (M, plan.N):
        out = out[:M, :plan.N]
    return out


class Stage1Params:
    """Pre-padded / pre-cast parameters for the VGG head (done ONCE, not per forward).

    Weights are stored (in_features, out_features) -- the transpose of torch nn.Linear
    -- so every layer is a plain x @ W + b MXU matmul.  Init matches the torch module:
    W ~ N(0, 0.01), b = 0.  weight_quant="int8" stores symmetric per-output-channel
    int8 weights + f32 scales (dequantized to bf16 in-kernel, scale folded into the
    f32 accumulator): ~2x less weight HBM traffic on this bandwidth-bound head.
    """

    def __init__(self, key, d_in=25088, d_hidden=4096, d_out=1000,
                 weight_dtype=jnp.bfloat16, weight_quant=None, hw=None):
        hw = hw or _hw_config()
        quantize = weight_quant == "int8"
        stored = jnp.int8 if quantize else weight_dtype
        layers = []
        for k, (din, dout) in zip(jax.random.split(key, 3),
                                  [(d_in, d_hidden), (d_hidden, d_hidden),
                                   (d_hidden, d_out)]):
            w = 0.01 * jax.random.normal(k, (din, dout), dtype=jnp.float32)
            b = jnp.zeros((dout,), jnp.float32)
            plan = plan_linear(din, dout, weight_dtype=stored, hw=hw)
            w_p, b_p, s_p = prepare_linear(w, b, plan, weight_dtype=weight_dtype,
                                           quantize=quantize)
            layers.append(LinearLayer(plan=plan, w=w_p, b=b_p, scale=s_p))
        self.layer35, self.layer38, self.layer41 = layers


def stage1_forward(params, x):
    """layer35+ReLU, layer38+ReLU, layer41.  Dropout 37/40 are identity (eval mode)."""
    # TODO(synk): training-mode dropout would need pltpu.prng_* masking in-kernel.
    h = linear(x, params.layer35, relu=True, out_dtype=jnp.bfloat16)
    h = linear(h, params.layer38, relu=True, out_dtype=jnp.bfloat16)
    return linear(h, params.layer41, relu=False, out_dtype=jnp.float32)


def stage1_reference(params, x):
    """Pure-JAX reference with the same numerics (bf16 operands, f32 accumulation)."""
    def lin(h, layer, relu):
        plan = layer.plan
        w = layer.w[:plan.K, :plan.N]
        b = layer.b[0, :plan.N]
        if layer.scale is not None:
            w = w.astype(jnp.float32).astype(jnp.bfloat16)
            y = jnp.dot(h.astype(jnp.bfloat16), w, preferred_element_type=jnp.float32)
            y = y * layer.scale[0, :plan.N] + b
        else:
            y = jnp.dot(h.astype(jnp.bfloat16), w,
                        preferred_element_type=jnp.float32) + b
        return jnp.maximum(y, 0.0) if relu else y

    h = lin(x, params.layer35, True).astype(jnp.bfloat16)
    h = lin(h, params.layer38, True).astype(jnp.bfloat16)
    return lin(h, params.layer41, False)


if __name__ == "__main__":
    # Small shapes shaped like the real head (25088 -> 4096 -> 4096 -> 1000),
    # deliberately not tile-aligned so the K/N padding paths are exercised.
    BATCH, D_IN, D_HID, D_OUT = 4, 1568, 512, 1000

    key = jax.random.PRNGKey(0)
    kx, kx2, kp = jax.random.split(key, 3)
    x = jax.random.normal(kx, (BATCH, D_IN), dtype=jnp.float32)

    # --- default bf16-weight path (faithful to the torch module, eval mode) ---
    params = Stage1Params(kp, D_IN, D_HID, D_OUT)
    out = jax.block_until_ready(stage1_forward(params, x))
    ref = stage1_reference(params, x)
    assert out.shape == (BATCH, D_OUT), out.shape
    assert jnp.allclose(out, ref, atol=1e-2, rtol=1e-2), "mismatch (bf16 path)"

    # --- K-tiled accumulator path (what the real 25088-K layer uses): tiny budget ---
    small_hw = dict(vmem_limit_bytes=32 * _MIB, weight_tile_budget=128 * 1024,
                    weight_buffers=3)
    w35 = params.layer35.w[:D_IN, :D_HID]
    b35 = params.layer35.b[0, :D_HID]
    plan_kt = plan_linear(D_IN, D_HID, weight_dtype=jnp.bfloat16, hw=small_hw)
    assert not plan_kt.collapse_k
    wp, bp, _ = prepare_linear(w35, b35, plan_kt)
    layer_kt = LinearLayer(plan=plan_kt, w=wp, b=bp, scale=None)
    out_kt = jax.block_until_ready(linear(x, layer_kt, relu=True, out_dtype=jnp.float32))
    ref_kt = jnp.maximum(
        jnp.dot(x.astype(jnp.bfloat16), w35, preferred_element_type=jnp.float32) + b35,
        0.0)
    assert jnp.allclose(out_kt, ref_kt, atol=1e-2, rtol=1e-2), "mismatch (K-tiled path)"

    # --- multi-M-block batch: N-outer / weight-resident collapse path ---
    x_big = jax.random.normal(kx2, (32, D_IN), dtype=jnp.float32)
    out_nm = jax.block_until_ready(
        linear(x_big, params.layer35, relu=True, out_dtype=jnp.float32, tm_cap=16))
    ref_nm = jnp.maximum(
        jnp.dot(x_big.astype(jnp.bfloat16), w35,
                preferred_element_type=jnp.float32) + b35, 0.0)
    assert jnp.allclose(out_nm, ref_nm, atol=1e-2, rtol=1e-2), "mismatch (N-outer path)"

    # --- int8 weight-streaming path (~2x less weight HBM traffic, the big lever) ---
    params_q = Stage1Params(kp, D_IN, D_HID, D_OUT, weight_quant="int8")
    out_q = jax.block_until_ready(stage1_forward(params_q, x))
    ref_q = stage1_reference(params_q, x)
    assert jnp.allclose(out_q, ref_q, atol=1e-2, rtol=1e-2), "mismatch (int8 path)"

    print("KERNEL_OK")
</pallas_src>

<mosaic_0001>
module attributes {stable_mosaic.version = 11 : i64} {
  func.func @_linear_flat_kernel(%arg0: i32, %arg1: i32, %arg2: memref<16x1664xbf16, #tpu.memory_space<vmem>>, %arg3: memref<1664x256xbf16, #tpu.memory_space<vmem>>, %arg4: memref<1x256xf32, #tpu.memory_space<vmem>>, %arg5: memref<16x256xbf16, #tpu.memory_space<vmem>>) attributes {dimension_semantics = [#tpu.dimension_semantics<parallel>, #tpu.dimension_semantics<parallel>], iteration_bounds = array<i64: 1, 2>, scalar_prefetch = 0 : i64, scratch_operands = 0 : i64, tpu.core_type = #tpu.core_type<tc>, window_params = [{transform_indices = @transform_0, window_bounds = array<i64: 16, 1664>}, {transform_indices = @transform_1, window_bounds = array<i64: 1664, 256>}, {transform_indices = @transform_2, window_bounds = array<i64: 1, 256>}, {transform_indices = @transform_3, window_bounds = array<i64: 16, 256>}]} {
    %c0 = arith.constant 0 : index
    %c0_0 = arith.constant 0 : index
    %0 = vector.load %arg3[%c0, %c0_0] : memref<1664x256xbf16, #tpu.memory_space<vmem>>, vector<1664x256xbf16>
    %c0_1 = arith.constant 0 : index
    %c0_2 = arith.constant 0 : index
    %1 = vector.load %arg2[%c0_1, %c0_2] : memref<16x1664xbf16, #tpu.memory_space<vmem>>, vector<16x1664xbf16>
    %cst = arith.constant dense<0.000000e+00> : vector<16x256xf32>
    %2 = tpu.matmul %1, %0, %cst {dimension_numbers = #tpu.dot_dimension_numbers<[1], [0], [0], [1], [0, 0, 1, 1], [], []>} : vector<16x1664xbf16>, vector<1664x256xbf16>, vector<16x256xf32> -> vector<16x256xf32>
    %c0_3 = arith.constant 0 : index
    %c0_4 = arith.constant 0 : index
    %3 = vector.load %arg4[%c0_3, %c0_4] : memref<1x256xf32, #tpu.memory_space<vmem>>, vector<1x256xf32>
    %4 = vector.broadcast %3 : vector<1x256xf32> to vector<16x256xf32>
    %5 = arith.addf %2, %4 : vector<16x256xf32>
    %cst_5 = arith.constant 0.000000e+00 : f32
    %6 = vector.broadcast %cst_5 : f32 to vector<16x256xf32>
    %7 = arith.maximumf %5, %6 : vector<16x256xf32>
    %8 = arith.truncf %7 : vector<16x256xf32> to vector<16x256xbf16>
    %c0_6 = arith.constant 0 : index
    %c0_7 = arith.constant 0 : index
    %9 = vector.load %arg5[%c0_6, %c0_7] : memref<16x256xbf16, #tpu.memory_space<vmem>>, vector<16x256xbf16>
    tpu.vector_store %arg5[%c0_6, %c0_7], %8 {strides = array<i32>} : memref<16x256xbf16, #tpu.memory_space<vmem>>, vector<16x256xbf16>,
    return
  }
  func.func @transform_0(%arg0: i32, %arg1: i32) -> (i32, i32) {
    %c0_i32 = arith.constant 0 : i32
    %c0_i32_0 = arith.constant 0 : i32
    return %arg0, %c0_i32 : i32, i32
  }
  func.func @transform_1(%arg0: i32, %arg1: i32) -> (i32, i32) {
    %c0_i32 = arith.constant 0 : i32
    %c0_i32_0 = arith.constant 0 : i32
    return %c0_i32, %arg1 : i32, i32
  }
  func.func @transform_2(%arg0: i32, %arg1: i32) -> (i32, i32) {
    %c0_i32 = arith.constant 0 : i32
    %c0_i32_0 = arith.constant 0 : i32
    return %c0_i32, %arg1 : i32, i32
  }
  func.func @transform_3(%arg0: i32, %arg1: i32) -> (i32, i32) {
    %c0_i32 = arith.constant 0 : i32
    return %arg0, %arg1 : i32, i32
  }
}

</mosaic_0001>

<llo_original>
// kernel: tpu_custom_call.1
$region0: #{tpu_custom_call.1}
  #allocation0 [shape = 'u32[]', space=smem, size = 0x4, offset = 0x4, fixed_abs, tag = 'smem constant byte address 0x4 - core index']
  #allocation1 [shape = 'u32[144,128]{1,0:T(1,128)}', space=vmem, size = 0x12000, scoped, tag = 'internal scratch']
  %s0 = inlined_call_operand.hbm [shape: bf16[16,1664], index: 0, kind: input, shape index: {}]
  %s1 = inlined_call_operand.hbm [shape: bf16[1664,512], index: 1, kind: input, shape index: {}]
  %s2 = inlined_call_operand.hbm [shape: f32[1,512], index: 2, kind: input, shape index: {}]
  %s3 = inlined_call_operand.hbm [shape: bf16[16,512], index: 3, kind: output, shape index: {}]
  %s4 = sld [smem:[#allocation0]]
  $region57: #{tpu_custom_call.1} parent=0
    _
  %s6 = ssub.s32 1, %s4
  %s7 = scalar_select 0, %s6, %s4
  $region1: #{tpu_custom_call.1} parent=0
    #allocation2 [shape = 'u8[53248]{0}', space=vmem, size = 0xd000, scoped, tag = 'input window, operand 0, single buffered']
    #allocation3 [shape = 's32[2]{0}', space=sflag, size = 0x8, scoped, tag = 'scoped memory for tpu_custom_call.1']
    #allocation4 [shape = 's32[2]{0}', space=sflag, size = 0x8, scoped, tag = 'scoped memory for tpu_custom_call.1']
    #allocation5 [shape = 'u8[1703936]{0}', space=vmem, size = 0x1a0000, scoped, tag = 'input window, operand 1']
    #allocation6 [shape = 's32[2]{0}', space=sflag, size = 0x8, scoped, tag = 'scoped memory for tpu_custom_call.1']
    #allocation7 [shape = 'u8[2048]{0}', space=vmem, size = 0x800, scoped, tag = 'input window, operand 2']
    #allocation8 [shape = 'u8[16384]{0}', space=vmem, size = 0x4000, scoped, tag = 'output window, operand 0']
    %8 = vsyncpa [#allocation3], 0
    %9 = vsyncpa [#allocation6], 0
    %s10 = scalar_lea.sflag [#allocation6], 1
    %11 = vsyncpa %s10, 0
    %12 = vsyncpa [#allocation4], 0
    %s13 = scalar_lea.sflag [#allocation4], 1
    %14 = vsyncpa %s13, 0
    loop: start=0, step=1, limit=4
    $region2: #{tpu_custom_call.1} parent=1 // loop_pre_header
      _
    $region3: #{tpu_custom_call.1} parent=1 // loop_header
      %s16 = sphi 0, %s20
      %p17 = scmp.ge.s32.totalorder %s16, 4
      %s23 = sphi 0, %s35
      %s24 = sphi 0, %s31
      %s25 = sphi 0, %s23
      %s26 = sphi 0, %s24
      %s27 = sphi 0, %s25
      %s28 = sphi 0, %s26
      %s38 = sphi 0, %s40
      %s41 = sphi 0, %s38
      %s42 = sphi 0, %s41
      %s58 = sphi 0, %s42
      %s64 = sphi 0, %s66
      %s67 = sphi 0, %s64
      %s68 = sphi 0, %s67
      %s84 = sphi 0, %s68
      %s90 = sphi 0, %s92
      %s93 = sphi 0, %s90
      %s94 = sphi 0, %s93
      %s110 = sphi 0, %s94
      %s118 = sphi 0, %s120
      %s121 = sphi 0, %s118
      %s122 = sphi 0, %s121
      %s138 = sphi 0, %s122
    $region4: #{tpu_custom_call.1} parent=1 // loop_header_branch
      %19 = sbr.rel (%p17) target = $region8
    $region5: #{tpu_custom_call.1} parent=1 // loop_body
      %s21 = ssub.s32 %s16, 1
      %s22 = ssub.s32 %s16, 2
      %s29 = sadd.s32 1, %s24
      %p30 = scmp.ge.s32.totalorder %s29, 2
      %s31 = scalar_select %p30, 0, %s29
      %s32 = sadd.s32 1, %s23
      %s33 = scalar_select %p30, %s32, %s23
      %p34 = scmp.ge.s32.totalorder %s33, 1
      %s35 = scalar_select %p34, 0, %s33
      %s36 = ssub.s32 %s23, %s35
      %p37 = scmp.eq.s32.totalorder %s36, 0
      %s39 = sadd.s32 %s38, 1
      %s40 = scalar_select %p37, %s38, %s39
      %p43 = pneg %p37
      %p44 = scmp.eq.s32.totalorder %s16, 1
      %p45 = por %p43, %p44
      %p46 = scmp.ne.s32.totalorder %s38, %s41
      %p47 = scmp.eq.s32.totalorder %s16, 0
      %p48 = por %p46, %p47
      %p49 = scmp.ne.s32.totalorder %s38, %s41
      %p50 = scmp.eq.s32.totalorder %s21, 1
      %p51 = por %p49, %p50
      %p52 = scmp.ne.s32.totalorder %s41, %s42
      %p53 = scmp.eq.s32.totalorder %s21, 0
      %p54 = por %p52, %p53
      %p55 = scmp.ne.s32.totalorder %s41, %s42
      %p56 = scmp.eq.s32.totalorder %s22, 1
      %p57 = por %p55, %p56
      %p59 = scmp.ne.s32.totalorder %s42, %s58
      %p60 = scmp.eq.s32.totalorder %s22, 0
      %p61 = por %p59, %p60
      %s62 = ssub.s32 %s24, %s31
      %p63 = scmp.eq.s32.totalorder %s62, 0
      %s65 = sadd.s32 %s64, 1
      %s66 = scalar_select %p63, %s64, %s65
      %p69 = pneg %p63
      %p70 = scmp.eq.s32.totalorder %s16, 1
      %p71 = por %p69, %p70
      %p72 = scmp.ne.s32.totalorder %s64, %s67
      %p73 = scmp.eq.s32.totalorder %s16, 0
      %p74 = por %p72, %p73
      %p75 = scmp.ne.s32.totalorder %s64, %s67
      %p76 = scmp.eq.s32.totalorder %s21, 1
      %p77 = por %p75, %p76
      %p78 = scmp.ne.s32.totalorder %s67, %s68
      %p79 = scmp.eq.s32.totalorder %s21, 0
      %p80 = por %p78, %p79
      %p81 = scmp.ne.s32.totalorder %s67, %s68
      %p82 = scmp.eq.s32.totalorder %s22, 1
      %p83 = por %p81, %p82
      %p85 = scmp.ne.s32.totalorder %s68, %s84
      %p86 = scmp.eq.s32.totalorder %s22, 0
      %p87 = por %p85, %p86
      %s88 = ssub.s32 %s24, %s31
      %p89 = scmp.eq.s32.totalorder %s88, 0
      %s91 = sadd.s32 %s90, 1
      %s92 = scalar_select %p89, %s90, %s91
      %p95 = pneg %p89
      %p96 = scmp.eq.s32.totalorder %s16, 1
      %p97 = por %p95, %p96
      %p98 = scmp.ne.s32.totalorder %s90, %s93
      %p99 = scmp.eq.s32.totalorder %s16, 0
      %p100 = por %p98, %p99
      %p101 = scmp.ne.s32.totalorder %s90, %s93
      %p102 = scmp.eq.s32.totalorder %s21, 1
      %p103 = por %p101, %p102
      %p104 = scmp.ne.s32.totalorder %s93, %s94
      %p105 = scmp.eq.s32.totalorder %s21, 0
      %p106 = por %p104, %p105
      %p107 = scmp.ne.s32.totalorder %s93, %s94
      %p108 = scmp.eq.s32.totalorder %s22, 1
      %p109 = por %p107, %p108
      %p111 = scmp.ne.s32.totalorder %s94, %s110
      %p112 = scmp.eq.s32.totalorder %s22, 0
      %p113 = por %p111, %p112
      %s114 = ssub.s32 %s23, %s35
      %s115 = ssub.s32 %s24, %s31
      %s116 = sor.u32 %s114, %s115
      %p117 = scmp.eq.s32.totalorder %s116, 0
      %s119 = sadd.s32 %s118, 1
      %s120 = scalar_select %p117, %s118, %s119
      %p123 = pneg %p117
      %p124 = scmp.eq.s32.totalorder %s16, 1
      %p125 = por %p123, %p124
      %p126 = scmp.ne.s32.totalorder %s118, %s121
      %p127 = scmp.eq.s32.totalorder %s16, 0
      %p128 = por %p126, %p127
      %p129 = scmp.ne.s32.totalorder %s118, %s121
      %p130 = scmp.eq.s32.totalorder %s21, 1
      %p131 = por %p129, %p130
      %p132 = scmp.ne.s32.totalorder %s121, %s122
      %p133 = scmp.eq.s32.totalorder %s21, 0
      %p134 = por %p132, %p133
      %p135 = scmp.ne.s32.totalorder %s121, %s122
      %p136 = scmp.eq.s32.totalorder %s22, 1
      %p137 = por %p135, %p136
      %p139 = scmp.ne.s32.totalorder %s122, %s138
      %p140 = scmp.eq.s32.totalorder %s22, 0
      %p141 = por %p139, %p140
      %p142 = scmp.le.s32.totalorder 1, %s16
      %p143 = scmp.lt.s32.totalorder %s16, 3
      %p144 = pnand %p142, %p143
      %p145 = pneg %p144
      // Predicated region
      $region9: #{tpu_custom_call.1} parent=5 // pred_check
        _
      $region10: #{tpu_custom_call.1} parent=5 // pred_check_branch
        %147 = sbr.rel (%p144) target = $region12
      $region11: #{tpu_custom_call.1} parent=5 // pred_region
        %s148 = ssub.s32 %s16, 1
        // Predicated region
        $region13: #{tpu_custom_call.1} parent=11 // pred_check
          %p149 = pneg %p54
        $region14: #{tpu_custom_call.1} parent=11 // pred_check_branch
          %151 = sbr.rel (%p149) target = $region16
        $region15: #{tpu_custom_call.1} parent=11 // pred_region
          %s152 = smul.u32 2, %s25
          %s154 = ssub.s32 1664, 1664
          %155 = vsyncadd [#allocation3], %s154
          %s156 = smul.addr %s152, 13
          %s157 = smul.addr %s156, 64
          %s158 = scalar_lea.hbm %s0, %s157
          %s159 = sshll.u32 [#allocation2], 4
          %s160 = int_to_ptr.vmem [resolvable:$true] %s159
          %165 = dma.hbm_to_vmem [thread:$0]  %s158, 1664, %s160, [#allocation3], 832, 832, 52
        $region16: #{tpu_custom_call.1} parent=11 // pred_fallthru
          _
      $region12: #{tpu_custom_call.1} parent=5 // pred_fallthru
        _
      %p166 = scmp.lt.s32.totalorder %s16, 2
      // Predicated region
      $region17: #{tpu_custom_call.1} parent=5 // pred_check
        %p167 = pneg %p166
      $region18: #{tpu_custom_call.1} parent=5 // pred_check_branch
        %169 = sbr.rel (%p167) target = $region20
      $region19: #{tpu_custom_call.1} parent=5 // pred_region
        // Predicated region
        $region21: #{tpu_custom_call.1} parent=19 // pred_check
          %p170 = pneg %p74
        $region22: #{tpu_custom_call.1} parent=19 // pred_check_branch
          %172 = sbr.rel (%p170) target = $region24
        $region23: #{tpu_custom_call.1} parent=19 // pred_region
          %s173 = sand.u32 %s16, 1
          %s174 = scalar_lea.sflag [#allocation6], %s173
          %s175 = sand.u32 %s64, 1
          %s176 = smul.addr %s175, 1664
          %s177 = scalar_lea.vmem [#allocation5], %s176
          %s178 = smul.u32 2, %s24
          %s180 = ssub.s32 26624, 26624
          %181 = vsyncadd %s174, %s180
          %s182 = smul.addr %s178, 64
          %s183 = scalar_lea.hbm %s1, %s182
          %s184 = sshll.u32 %s177, 4
          %s185 = int_to_ptr.vmem [resolvable:$true] %s184
          %190 = dma.hbm_to_vmem [thread:$0]  %s183, 26624, %s185, %s174, 256, 128, 8
        $region24: #{tpu_custom_call.1} parent=19 // pred_fallthru
          _
        // Predicated region
        $region25: #{tpu_custom_call.1} parent=19 // pred_check
          %p191 = pneg %p100
        $region26: #{tpu_custom_call.1} parent=19 // pred_check_branch
          %193 = sbr.rel (%p191) target = $region28
        $region27: #{tpu_custom_call.1} parent=19 // pred_region
          %s194 = sand.u32 %s16, 1
          %s195 = scalar_lea.sflag [#allocation6], %s194
          %s196 = sand.u32 %s90, 1
          %s197 = smul.addr %s196, 2
          %s198 = scalar_lea.vmem [#allocation7], %s197
          %s199 = smul.u32 2, %s24
          %s201 = ssub.s32 32, 32
          %202 = vsyncadd %s195, %s201
          %s203 = smul.addr %s199, 16
          %s204 = scalar_lea.hbm %s2, %s203
          %s206 = sshll.u32 %s198, 4
          %s207 = int_to_ptr.vmem [resolvable:$true] %s206
          %209 = dma.hbm_to_vmem [thread:$0]  %s204, 32, %s207, %s195
        $region28: #{tpu_custom_call.1} parent=19 // pred_fallthru
          _
      $region20: #{tpu_custom_call.1} parent=5 // pred_fallthru
        _
      %p210 = scmp.le.s32.totalorder 1, %s16
      %p211 = scmp.lt.s32.totalorder %s16, 3
      %p212 = pnand %p210, %p211
      %p213 = pneg %p212
      // Predicated region
      $region29: #{tpu_custom_call.1} parent=5 // pred_check
        _
      $region30: #{tpu_custom_call.1} parent=5 // pred_check_branch
        %215 = sbr.rel (%p212) target = $region32
      $region31: #{tpu_custom_call.1} parent=5 // pred_region
        %s216 = ssub.s32 %s16, 1
        // Predicated region
        $region33: #{tpu_custom_call.1} parent=31 // pred_check
          %p217 = pneg %p54
        $region34: #{tpu_custom_call.1} parent=31 // pred_check_branch
          %219 = sbr.rel (%p217) target = $region36
        $region35: #{tpu_custom_call.1} parent=31 // pred_region
          %220 = dma.done [#allocation3], 1664
        $region36: #{tpu_custom_call.1} parent=31 // pred_fallthru
          _
        %s221 = sand.u32 %s21, 1
        %s222 = scalar_lea.sflag [#allocation6], %s221
        %s223 = sand.u32 %s67, 1
        %s224 = smul.addr %s223, 1664
        %s225 = scalar_lea.vmem [#allocation5], %s224
        // Predicated region
        $region37: #{tpu_custom_call.1} parent=31 // pred_check
          %p226 = pneg %p80
        $region38: #{tpu_custom_call.1} parent=31 // pred_check_branch
          %228 = sbr.rel (%p226) target = $region40
        $region39: #{tpu_custom_call.1} parent=31 // pred_region
          %229 = dma.done %s222, 26624
        $region40: #{tpu_custom_call.1} parent=31 // pred_fallthru
          _
        %s230 = sand.u32 %s21, 1
        %s231 = scalar_lea.sflag [#allocation6], %s230
        %s232 = sand.u32 %s93, 1
        %s233 = smul.addr %s232, 2
        %s234 = scalar_lea.vmem [#allocation7], %s233
        // Predicated region
        $region41: #{tpu_custom_call.1} parent=31 // pred_check
          %p235 = pneg %p106
        $region42: #{tpu_custom_call.1} parent=31 // pred_check_branch
          %237 = sbr.rel (%p235) target = $region44
        $region43: #{tpu_custom_call.1} parent=31 // pred_region
          %238 = dma.done %s231, 32
        $region44: #{tpu_custom_call.1} parent=31 // pred_fallthru
          _
        %p239 = pneg %p54
        %p240 = pneg %p51
        %s241 = sand.u32 %s21, 1
        %s242 = scalar_lea.sflag [#allocation6], %s241
        %s243 = sand.u32 %s67, 1
        %s244 = smul.addr %s243, 1664
        %s245 = scalar_lea.vmem [#allocation5], %s244
        %p246 = pneg %p80
        %p247 = pneg %p77
        %s248 = sand.u32 %s21, 1
        %s249 = scalar_lea.sflag [#allocation6], %s248
        %s250 = sand.u32 %s93, 1
        %s251 = smul.addr %s250, 2
        %s252 = scalar_lea.vmem [#allocation7], %s251
        %p253 = pneg %p106
        %p254 = pneg %p103
        %p255 = pneg %p134
        %p256 = pneg %p131
        %s257 = sand.u32 %s121, 1
        %s258 = scalar_lea.sflag [#allocation4], %s257
        %s259 = sand.u32 %s121, 1
        %s260 = smul.addr %s259, 16
        %s261 = scalar_lea.vmem [#allocation8], %s260
        %s262 = smul.u32 2, %s25
        %s263 = smul.u32 2, %s26
        %s264 = smul.u32 2, %s26
        %s265 = smul.u32 2, %s25
        %s266 = smul.u32 2, %s26
        %v268 = vld [vmem:[%s225] sm:$0xff]
        %v269 = vld [vmem:[%s225 + $0x8] sm:$0xff]
        %v270 = vld [vmem:[%s225 + $0x10] sm:$0xff]
        %v271 = vld [vmem:[%s225 + $0x18] sm:$0xff]
        %v272 = vld [vmem:[%s225 + $0x20] sm:$0xff]
        %v273 = vld [vmem:[%s225 + $0x28] sm:$0xff]
        %v274 = vld [vmem:[%s225 + $0x30] sm:$0xff]
        %v275 = vld [vmem:[%s225 + $0x38] sm:$0xff]
        %v276 = vld [vmem:[%s225 + $0x40] sm:$0xff]
        %v277 = vld [vmem:[%s225 + $0x48] sm:$0xff]
        %v278 = vld [vmem:[%s225 + $0x50] sm:$0xff]
        %v279 = vld [vmem:[%s225 + $0x58] sm:$0xff]
        %v280 = vld [vmem:[%s225 + $0x60] sm:$0xff]
        %v281 = vld [vmem:[%s225 + $0x68] sm:$0xff]
        %v282 = vld [vmem:[%s225 + $0x70] sm:$0xff]
        %v283 = vld [vmem:[%s225 + $0x78] sm:$0xff]
        %v284 = vld [vmem:[%s225 + $0x80] sm:$0xff]
        %v285 = vld [vmem:[%s225 + $0x88] sm:$0xff]
        %v286 = vld [vmem:[%s225 + $0x90] sm:$0xff]
        %v287 = vld [vmem:[%s225 + $0x98] sm:$0xff]
        %v288 = vld [vmem:[%s225 + $0xa0] sm:$0xff]
        %v289 = vld [vmem:[%s225 + $0xa8] sm:$0xff]
        %v290 = vld [vmem:[%s225 + $0xb0] sm:$0xff]
        %v291 = vld [vmem:[%s225 + $0xb8] sm:$0xff]
        %v292 = vld [vmem:[%s225 + $0xc0] sm:$0xff]
        %v293 = vld [vmem:[%s225 + $0xc8] sm:$0xff]
        %v294 = vld [vmem:[%s225 + $0xd0] sm:$0xff]
        %v295 = vld [vmem:[%s225 + $0xd8] sm:$0xff]
        %v296 = vld [vmem:[%s225 + $0xe0] sm:$0xff]
        %v297 = vld [vmem:[%s225 + $0xe8] sm:$0xff]
        %v298 = vld [vmem:[%s225 + $0xf0] sm:$0xff]
        %v299 = vld [vmem:[%s225 + $0xf8] sm:$0xff]
        %v300 = vld [vmem:[%s225 + $0x100] sm:$0xff]
        %v301 = vld [vmem:[%s225 + $0x108] sm:$0xff]
        %v302 = vld [vmem:[%s225 + $0x110] sm:$0xff]
        %v303 = vld [vmem:[%s225 + $0x118] sm:$0xff]
        %v304 = vld [vmem:[%s225 + $0x120] sm:$0xff]
        %v305 = vld [vmem:[%s225 + $0x128] sm:$0xff]
        %v306 = vld [vmem:[%s225 + $0x130] sm:$0xff]
        %v307 = vld [vmem:[%s225 + $0x138] sm:$0xff]
        %v308 = vld [vmem:[%s225 + $0x140] sm:$0xff]
        %v309 = vld [vmem:[%s225 + $0x148] sm:$0xff]
        %v310 = vld [vmem:[%s225 + $0x150] sm:$0xff]
        %v311 = vld [vmem:[%s225 + $0x158] sm:$0xff]
        %v312 = vld [vmem:[%s225 + $0x160] sm:$0xff]
        %v313 = vld [vmem:[%s225 + $0x168] sm:$0xff]
        %v314 = vld [vmem:[%s225 + $0x170] sm:$0xff]
        %v315 = vld [vmem:[%s225 + $0x178] sm:$0xff]
        %v316 = vld [vmem:[%s225 + $0x180] sm:$0xff]
        %v317 = vld [vmem:[%s225 + $0x188] sm:$0xff]
        %v318 = vld [vmem:[%s225 + $0x190] sm:$0xff]
        %v319 = vld [vmem:[%s225 + $0x198] sm:$0xff]
        %v320 = vld [vmem:[%s225 + $0x1a0] sm:$0xff]
        %v321 = vld [vmem:[%s225 + $0x1a8] sm:$0xff]
        %v322 = vld [vmem:[%s225 + $0x1b0] sm:$0xff]
        %v323 = vld [vmem:[%s225 + $0x1b8] sm:$0xff]
        %v324 = vld [vmem:[%s225 + $0x1c0] sm:$0xff]
        %v325 = vld [vmem:[%s225 + $0x1c8] sm:$0xff]
        %v326 = vld [vmem:[%s225 + $0x1d0] sm:$0xff]
        %v327 = vld [vmem:[%s225 + $0x1d8] sm:$0xff]
        %v328 = vld [vmem:[%s225 + $0x1e0] sm:$0xff]
        %v329 = vld [vmem:[%s225 + $0x1e8] sm:$0xff]
        %v330 = vld [vmem:[%s225 + $0x1f0] sm:$0xff]
        %v331 = vld [vmem:[%s225 + $0x1f8] sm:$0xff]
        %v332 = vld [vmem:[%s225 + $0x200] sm:$0xff]
        %v333 = vld [vmem:[%s225 + $0x208] sm:$0xff]
        %v334 = vld [vmem:[%s225 + $0x210] sm:$0xff]
        %v335 = vld [vmem:[%s225 + $0x218] sm:$0xff]
        %v336 = vld [vmem:[%s225 + $0x220] sm:$0xff]
        %v337 = vld [vmem:[%s225 + $0x228] sm:$0xff]
        %v338 = vld [vmem:[%s225 + $0x230] sm:$0xff]
        %v339 = vld [vmem:[%s225 + $0x238] sm:$0xff]
        %v340 = vld [vmem:[%s225 + $0x240] sm:$0xff]
        %v341 = vld [vmem:[%s225 + $0x248] sm:$0xff]
        %v342 = vld [vmem:[%s225 + $0x250] sm:$0xff]
        %v343 = vld [vmem:[%s225 + $0x258] sm:$0xff]
        %v344 = vld [vmem:[%s225 + $0x260] sm:$0xff]
        %v345 = vld [vmem:[%s225 + $0x268] sm:$0xff]
        %v346 = vld [vmem:[%s225 + $0x270] sm:$0xff]
        %v347 = vld [vmem:[%s225 + $0x278] sm:$0xff]
        %v348 = vld [vmem:[%s225 + $0x280] sm:$0xff]
        %v349 = vld [vmem:[%s225 + $0x288] sm:$0xff]
        %v350 = vld [vmem:[%s225 + $0x290] sm:$0xff]
        %v351 = vld [vmem:[%s225 + $0x298] sm:$0xff]
        %v352 = vld [vmem:[%s225 + $0x2a0] sm:$0xff]
        %v353 = vld [vmem:[%s225 + $0x2a8] sm:$0xff]
        %v354 = vld [vmem:[%s225 + $0x2b0] sm:$0xff]
        %v355 = vld [vmem:[%s225 + $0x2b8] sm:$0xff]
        %v356 = vld [vmem:[%s225 + $0x2c0] sm:$0xff]
        %v357 = vld [vmem:[%s225 + $0x2c8] sm:$0xff]
        %v358 = vld [vmem:[%s225 + $0x2d0] sm:$0xff]
        %v359 = vld [vmem:[%s225 + $0x2d8] sm:$0xff]
        %v360 = vld [vmem:[%s225 + $0x2e0] sm:$0xff]
        %v361 = vld [vmem:[%s225 + $0x2e8] sm:$0xff]
        %v362 = vld [vmem:[%s225 + $0x2f0] sm:$0xff]
        %v363 = vld [vmem:[%s225 + $0x2f8] sm:$0xff]
        %v364 = vld [vmem:[%s225 + $0x300] sm:$0xff]
        %v365 = vld [vmem:[%s225 + $0x308] sm:$0xff]
        %v366 = vld [vmem:[%s225 + $0x310] sm:$0xff]
        %v367 = vld [vmem:[%s225 + $0x318] sm:$0xff]
        %v368 = vld [vmem:[%s225 + $0x320] sm:$0xff]
        %v369 = vld [vmem:[%s225 + $0x328] sm:$0xff]
        %v370 = vld [vmem:[%s225 + $0x330] sm:$0xff]
        %v371 = vld [vmem:[%s225 + $0x338] sm:$0xff]
        %v372 = vld [vmem:[%s225 + $0x340] sm:$0xff]
        %v373 = vld [vmem:[%s225 + $0x348] sm:$0xff]
        %v374 = vld [vmem:[%s225 + $0x350] sm:$0xff]
        %v375 = vld [vmem:[%s225 + $0x358] sm:$0xff]
        %v376 = vld [vmem:[%s225 + $0x360] sm:$0xff]
        %v377 = vld [vmem:[%s225 + $0x368] sm:$0xff]
        %v378 = vld [vmem:[%s225 + $0x370] sm:$0xff]
        %v379 = vld [vmem:[%s225 + $0x378] sm:$0xff]
        %v380 = vld [vmem:[%s225 + $0x380] sm:$0xff]
        %v381 = vld [vmem:[%s225 + $0x388] sm:$0xff]
        %v382 = vld [vmem:[%s225 + $0x390] sm:$0xff]
        %v383 = vld [vmem:[%s225 + $0x398] sm:$0xff]
        %v384 = vld [vmem:[%s225 + $0x3a0] sm:$0xff]
        %v385 = vld [vmem:[%s225 + $0x3a8] sm:$0xff]
        %v386 = vld [vmem:[%s225 + $0x3b0] sm:$0xff]
        %v387 = vld [vmem:[%s225 + $0x3b8] sm:$0xff]
        %v388 = vld [vmem:[%s225 + $0x3c0] sm:$0xff]
        %v389 = vld [vmem:[%s225 + $0x3c8] sm:$0xff]
        %v390 = vld [vmem:[%s225 + $0x3d0] sm:$0xff]
        %v391 = vld [vmem:[%s225 + $0x3d8] sm:$0xff]
        %v392 = vld [vmem:[%s225 + $0x3e0] sm:$0xff]
        %v393 = vld [vmem:[%s225 + $0x3e8] sm:$0xff]
        %v394 = vld [vmem:[%s225 + $0x3f0] sm:$0xff]
        %v395 = vld [vmem:[%s225 + $0x3f8] sm:$0xff]
        %v396 = vld [vmem:[%s225 + $0x400] sm:$0xff]
        %v397 = vld [vmem:[%s225 + $0x408] sm:$0xff]
        %v398 = vld [vmem:[%s225 + $0x410] sm:$0xff]
        %v399 = vld [vmem:[%s225 + $0x418] sm:$0xff]
        %v400 = vld [vmem:[%s225 + $0x420] sm:$0xff]
        %v401 = vld [vmem:[%s225 + $0x428] sm:$0xff]
        %v402 = vld [vmem:[%s225 + $0x430] sm:$0xff]
        %v403 = vld [vmem:[%s225 + $0x438] sm:$0xff]
        %v404 = vld [vmem:[%s225 + $0x440] sm:$0xff]
        %v405 = vld [vmem:[%s225 + $0x448] sm:$0xff]
        %v406 = vld [vmem:[%s225 + $0x450] sm:$0xff]
        %v407 = vld [vmem:[%s225 + $0x458] sm:$0xff]
        %v408 = vld [vmem:[%s225 + $0x460] sm:$0xff]
        %v409 = vld [vmem:[%s225 + $0x468] sm:$0xff]
        %v410 = vld [vmem:[%s225 + $0x470] sm:$0xff]
        %v411 = vld [vmem:[%s225 + $0x478] sm:$0xff]
        %v412 = vld [vmem:[%s225 + $0x480] sm:$0xff]
        %v413 = vld [vmem:[%s225 + $0x488] sm:$0xff]
        %v414 = vld [vmem:[%s225 + $0x490] sm:$0xff]
        %v415 = vld [vmem:[%s225 + $0x498] sm:$0xff]
        %v416 = vld [vmem:[%s225 + $0x4a0] sm:$0xff]
        %v417 = vld [vmem:[%s225 + $0x4a8] sm:$0xff]
        %v418 = vld [vmem:[%s225 + $0x4b0] sm:$0xff]
        %v419 = vld [vmem:[%s225 + $0x4b8] sm:$0xff]
        %v420 = vld [vmem:[%s225 + $0x4c0] sm:$0xff]
        %v421 = vld [vmem:[%s225 + $0x4c8] sm:$0xff]
        %v422 = vld [vmem:[%s225 + $0x4d0] sm:$0xff]
        %v423 = vld [vmem:[%s225 + $0x4d8] sm:$0xff]
        %v424 = vld [vmem:[%s225 + $0x4e0] sm:$0xff]
        %v425 = vld [vmem:[%s225 + $0x4e8] sm:$0xff]
        %v426 = vld [vmem:[%s225 + $0x4f0] sm:$0xff]
        %v427 = vld [vmem:[%s225 + $0x4f8] sm:$0xff]
        %v428 = vld [vmem:[%s225 + $0x500] sm:$0xff]
        %v429 = vld [vmem:[%s225 + $0x508] sm:$0xff]
        %v430 = vld [vmem:[%s225 + $0x510] sm:$0xff]
        %v431 = vld [vmem:[%s225 + $0x518] sm:$0xff]
        %v432 = vld [vmem:[%s225 + $0x520] sm:$0xff]
        %v433 = vld [vmem:[%s225 + $0x528] sm:$0xff]
        %v434 = vld [vmem:[%s225 + $0x530] sm:$0xff]
        %v435 = vld [vmem:[%s225 + $0x538] sm:$0xff]
        %v436 = vld [vmem:[%s225 + $0x540] sm:$0xff]
        %v437 = vld [vmem:[%s225 + $0x548] sm:$0xff]
        %v438 = vld [vmem:[%s225 + $0x550] sm:$0xff]
        %v439 = vld [vmem:[%s225 + $0x558] sm:$0xff]
        %v440 = vld [vmem:[%s225 + $0x560] sm:$0xff]
        %v441 = vld [vmem:[%s225 + $0x568] sm:$0xff]
        %v442 = vld [vmem:[%s225 + $0x570] sm:$0xff]
        %v443 = vld [vmem:[%s225 + $0x578] sm:$0xff]
        %v444 = vld [vmem:[%s225 + $0x580] sm:$0xff]
        %v445 = vld [vmem:[%s225 + $0x588] sm:$0xff]
        %v446 = vld [vmem:[%s225 + $0x590] sm:$0xff]
        %v447 = vld [vmem:[%s225 + $0x598] sm:$0xff]
        %v448 = vld [vmem:[%s225 + $0x5a0] sm:$0xff]
        %v449 = vld [vmem:[%s225 + $0x5a8] sm:$0xff]
        %v450 = vld [vmem:[%s225 + $0x5b0] sm:$0xff]
        %v451 = vld [vmem:[%s225 + $0x5b8] sm:$0xff]
        %v452 = vld [vmem:[%s225 + $0x5c0] sm:$0xff]
        %v453 = vld [vmem:[%s225 + $0x5c8] sm:$0xff]
        %v454 = vld [vmem:[%s225 + $0x5d0] sm:$0xff]
        %v455 = vld [vmem:[%s225 + $0x5d8] sm:$0xff]
        %v456 = vld [vmem:[%s225 + $0x5e0] sm:$0xff]
        %v457 = vld [vmem:[%s225 + $0x5e8] sm:$0xff]
        %v458 = vld [vmem:[%s225 + $0x5f0] sm:$0xff]
        %v459 = vld [vmem:[%s225 + $0x5f8] sm:$0xff]
        %v460 = vld [vmem:[%s225 + $0x600] sm:$0xff]
        %v461 = vld [vmem:[%s225 + $0x608] sm:$0xff]
        %v462 = vld [vmem:[%s225 + $0x610] sm:$0xff]
        %v463 = vld [vmem:[%s225 + $0x618] sm:$0xff]
        %v464 = vld [vmem:[%s225 + $0x620] sm:$0xff]
        %v465 = vld [vmem:[%s225 + $0x628] sm:$0xff]
        %v466 = vld [vmem:[%s225 + $0x630] sm:$0xff]
        %v467 = vld [vmem:[%s225 + $0x638] sm:$0xff]
        %v468 = vld [vmem:[%s225 + $0x640] sm:$0xff]
        %v469 = vld [vmem:[%s225 + $0x648] sm:$0xff]
        %v470 = vld [vmem:[%s225 + $0x650] sm:$0xff]
        %v471 = vld [vmem:[%s225 + $0x658] sm:$0xff]
        %v472 = vld [vmem:[%s225 + $0x660] sm:$0xff]
        %v473 = vld [vmem:[%s225 + $0x668] sm:$0xff]
        %v474 = vld [vmem:[%s225 + $0x670] sm:$0xff]
        %v475 = vld [vmem:[%s225 + $0x678] sm:$0xff]
        %v476 = vld [vmem:[#allocation2] sm:$0xff]
        %v477 = vld [vmem:[#allocation2 + $0x8] sm:$0xff]
        %v478 = vld [vmem:[#allocation2 + $0x10] sm:$0xff]
        %v479 = vld [vmem:[#allocation2 + $0x18] sm:$0xff]
        %v480 = vld [vmem:[#allocation2 + $0x20] sm:$0xff]
        %v481 = vld [vmem:[#allocation2 + $0x28] sm:$0xff]
        %v482 = vld [vmem:[#allocation2 + $0x30] sm:$0xf]
        %v483 = vld [vmem:[#allocation2 + $0x34] sm:$0xff]
        %v484 = vld [vmem:[#allocation2 + $0x3c] sm:$0xff]
        %v485 = vld [vmem:[#allocation2 + $0x44] sm:$0xff]
        %v486 = vld [vmem:[#allocation2 + $0x4c] sm:$0xff]
        %v487 = vld [vmem:[#allocation2 + $0x54] sm:$0xff]
        %v488 = vld [vmem:[#allocation2 + $0x5c] sm:$0xff]
        %v489 = vld [vmem:[#allocation2 + $0x64] sm:$0xf]
        %v490 = vld [vmem:[%s234] sm:$0x3]
        %v492 = vlaneseq
        %v493 = vshrl.u32 %v492, 7
        %v494 = vsub.s32 0, %v493
        %v495 = vrot.slane %v490, %v494
        %v496 = vlaneseq
        %v497 = vshrl.u32 %v496, 7
        %v498 = vsub.s32 1, %v497
        %v499 = vrot.slane %v490, %v498
        %v516 = vunpack.c.l.b16 %v476
        %v517 = vunpack.c.h.b16 %v476
        %v518 = vunpack.c.l.b16 %v477
        %v519 = vunpack.c.h.b16 %v477
        %v520 = vunpack.c.l.b16 %v478
        %v521 = vunpack.c.h.b16 %v478
        %v522 = vunpack.c.l.b16 %v479
        %v523 = vunpack.c.h.b16 %v479
        %v524 = vunpack.c.l.b16 %v480
        %v525 = vunpack.c.h.b16 %v480
        %v526 = vunpack.c.l.b16 %v481
        %v527 = vunpack.c.h.b16 %v481
        %v528 = vunpack.c.l.b16 %v482
        %v529 = vunpack.c.l.b16 %v483
        %v530 = vunpack.c.h.b16 %v483
        %v531 = vunpack.c.l.b16 %v484
        %v532 = vunpack.c.h.b16 %v484
        %v533 = vunpack.c.l.b16 %v485
        %v534 = vunpack.c.h.b16 %v485
        %v535 = vunpack.c.l.b16 %v486
        %v536 = vunpack.c.h.b16 %v486
        %v537 = vunpack.c.l.b16 %v487
        %v538 = vunpack.c.h.b16 %v487
        %v539 = vunpack.c.l.b16 %v488
        %v540 = vunpack.c.h.b16 %v488
        %v541 = vunpack.c.l.b16 %v489
        %v542 = vpack.c.b16 %v529, %v516
        %v543 = vpack.c.b16 %v530, %v517
        %v544 = vpack.c.b16 %v531, %v518
        %v545 = vpack.c.b16 %v532, %v519
        %v546 = vpack.c.b16 %v533, %v520
        %v547 = vpack.c.b16 %v534, %v521
        %v548 = vpack.c.b16 %v535, %v522
        %v549 = vpack.c.b16 %v536, %v523
        %v550 = vpack.c.b16 %v537, %v524
        %v551 = vpack.c.b16 %v538, %v525
        %v552 = vpack.c.b16 %v539, %v526
        %v553 = vpack.c.b16 %v540, %v527
        %v554 = vpack.c.b16 %v541, %v528
        %v776 = vunpack.c.l.b16 %v268
        %v777 = vunpack.c.h.b16 %v268
        %v778 = vunpack.c.l.b16 %v269
        %v779 = vunpack.c.h.b16 %v269
        %v780 = vunpack.c.l.b16 %v270
        %v781 = vunpack.c.h.b16 %v270
        %v782 = vunpack.c.l.b16 %v271
        %v783 = vunpack.c.h.b16 %v271
        %v784 = vunpack.c.l.b16 %v272
        %v785 = vunpack.c.h.b16 %v272
        %v786 = vunpack.c.l.b16 %v273
        %v787 = vunpack.c.h.b16 %v273
        %v788 = vunpack.c.l.b16 %v274
        %v789 = vunpack.c.h.b16 %v274
        %v790 = vunpack.c.l.b16 %v275
        %v791 = vunpack.c.h.b16 %v275
        %v792 = vunpack.c.l.b16 %v276
        %v793 = vunpack.c.h.b16 %v276
        %v794 = vunpack.c.l.b16 %v277
        %v795 = vunpack.c.h.b16 %v277
        %v796 = vunpack.c.l.b16 %v278
        %v797 = vunpack.c.h.b16 %v278
        %v798 = vunpack.c.l.b16 %v279
        %v799 = vunpack.c.h.b16 %v279
        %v800 = vunpack.c.l.b16 %v280
        %v801 = vunpack.c.h.b16 %v280
        %v802 = vunpack.c.l.b16 %v281
        %v803 = vunpack.c.h.b16 %v281
        %v804 = vunpack.c.l.b16 %v282
        %v805 = vunpack.c.h.b16 %v282
        %v806 = vunpack.c.l.b16 %v283
        %v807 = vunpack.c.h.b16 %v283
        %v808 = vunpack.c.l.b16 %v284
        %v809 = vunpack.c.h.b16 %v284
        %v810 = vunpack.c.l.b16 %v285
        %v811 = vunpack.c.h.b16 %v285
        %v812 = vunpack.c.l.b16 %v286
        %v813 = vunpack.c.h.b16 %v286
        %v814 = vunpack.c.l.b16 %v287
        %v815 = vunpack.c.h.b16 %v287
        %v816 = vunpack.c.l.b16 %v288
        %v817 = vunpack.c.h.b16 %v288
        %v818 = vunpack.c.l.b16 %v289
        %v819 = vunpack.c.h.b16 %v289
        %v820 = vunpack.c.l.b16 %v290
        %v821 = vunpack.c.h.b16 %v290
        %v822 = vunpack.c.l.b16 %v291
        %v823 = vunpack.c.h.b16 %v291
        %v824 = vunpack.c.l.b16 %v292
        %v825 = vunpack.c.h.b16 %v292
        %v826 = vunpack.c.l.b16 %v293
        %v827 = vunpack.c.h.b16 %v293
        %v828 = vunpack.c.l.b16 %v294
        %v829 = vunpack.c.h.b16 %v294
        %v830 = vunpack.c.l.b16 %v295
        %v831 = vunpack.c.h.b16 %v295
        %v832 = vunpack.c.l.b16 %v296
        %v833 = vunpack.c.h.b16 %v296
        %v834 = vunpack.c.l.b16 %v297
        %v835 = vunpack.c.h.b16 %v297
        %v836 = vunpack.c.l.b16 %v298
        %v837 = vunpack.c.h.b16 %v298
        %v838 = vunpack.c.l.b16 %v299
        %v839 = vunpack.c.h.b16 %v299
        %v840 = vunpack.c.l.b16 %v300
        %v841 = vunpack.c.h.b16 %v300
        %v842 = vunpack.c.l.b16 %v301
        %v843 = vunpack.c.h.b16 %v301
        %v844 = vunpack.c.l.b16 %v302
        %v845 = vunpack.c.h.b16 %v302
        %v846 = vunpack.c.l.b16 %v303
        %v847 = vunpack.c.h.b16 %v303
        %v848 = vunpack.c.l.b16 %v304
        %v849 = vunpack.c.h.b16 %v304
        %v850 = vunpack.c.l.b16 %v305
        %v851 = vunpack.c.h.b16 %v305
        %v852 = vunpack.c.l.b16 %v306
        %v853 = vunpack.c.h.b16 %v306
        %v854 = vunpack.c.l.b16 %v307
        %v855 = vunpack.c.h.b16 %v307
        %v856 = vunpack.c.l.b16 %v308
        %v857 = vunpack.c.h.b16 %v308
        %v858 = vunpack.c.l.b16 %v309
        %v859 = vunpack.c.h.b16 %v309
        %v860 = vunpack.c.l.b16 %v310
        %v861 = vunpack.c.h.b16 %v310
        %v862 = vunpack.c.l.b16 %v311
        %v863 = vunpack.c.h.b16 %v311
        %v864 = vunpack.c.l.b16 %v312
        %v865 = vunpack.c.h.b16 %v312
        %v866 = vunpack.c.l.b16 %v313
        %v867 = vunpack.c.h.b16 %v313
        %v868 = vunpack.c.l.b16 %v314
        %v869 = vunpack.c.h.b16 %v314
        %v870 = vunpack.c.l.b16 %v315
        %v871 = vunpack.c.h.b16 %v315
        %v872 = vunpack.c.l.b16 %v316
        %v873 = vunpack.c.h.b16 %v316
        %v874 = vunpack.c.l.b16 %v317
        %v875 = vunpack.c.h.b16 %v317
        %v876 = vunpack.c.l.b16 %v318
        %v877 = vunpack.c.h.b16 %v318
        %v878 = vunpack.c.l.b16 %v319
        %v879 = vunpack.c.h.b16 %v319
        %v880 = vunpack.c.l.b16 %v320
        %v881 = vunpack.c.h.b16 %v320
        %v882 = vunpack.c.l.b16 %v321
        %v883 = vunpack.c.h.b16 %v321
        %v884 = vunpack.c.l.b16 %v322
        %v885 = vunpack.c.h.b16 %v322
        %v886 = vunpack.c.l.b16 %v323
        %v887 = vunpack.c.h.b16 %v323
        %v888 = vunpack.c.l.b16 %v324
        %v889 = vunpack.c.h.b16 %v324
        %v890 = vunpack.c.l.b16 %v325
        %v891 = vunpack.c.h.b16 %v325
        %v892 = vunpack.c.l.b16 %v326
        %v893 = vunpack.c.h.b16 %v326
        %v894 = vunpack.c.l.b16 %v327
        %v895 = vunpack.c.h.b16 %v327
        %v896 = vunpack.c.l.b16 %v328
        %v897 = vunpack.c.h.b16 %v328
        %v898 = vunpack.c.l.b16 %v329
        %v899 = vunpack.c.h.b16 %v329
        %v900 = vunpack.c.l.b16 %v330
        %v901 = vunpack.c.h.b16 %v330
        %v902 = vunpack.c.l.b16 %v331
        %v903 = vunpack.c.h.b16 %v331
        %v904 = vunpack.c.l.b16 %v332
        %v905 = vunpack.c.h.b16 %v332
        %v906 = vunpack.c.l.b16 %v333
        %v907 = vunpack.c.h.b16 %v333
        %v908 = vunpack.c.l.b16 %v334
        %v909 = vunpack.c.h.b16 %v334
        %v910 = vunpack.c.l.b16 %v335
        %v911 = vunpack.c.h.b16 %v335
        %v912 = vunpack.c.l.b16 %v336
        %v913 = vunpack.c.h.b16 %v336
        %v914 = vunpack.c.l.b16 %v337
        %v915 = vunpack.c.h.b16 %v337
        %v916 = vunpack.c.l.b16 %v338
        %v917 = vunpack.c.h.b16 %v338
        %v918 = vunpack.c.l.b16 %v339
        %v919 = vunpack.c.h.b16 %v339
        %v920 = vunpack.c.l.b16 %v340
        %v921 = vunpack.c.h.b16 %v340
        %v922 = vunpack.c.l.b16 %v341
        %v923 = vunpack.c.h.b16 %v341
        %v924 = vunpack.c.l.b16 %v342
        %v925 = vunpack.c.h.b16 %v342
        %v926 = vunpack.c.l.b16 %v343
        %v927 = vunpack.c.h.b16 %v343
        %v928 = vunpack.c.l.b16 %v344
        %v929 = vunpack.c.h.b16 %v344
        %v930 = vunpack.c.l.b16 %v345
        %v931 = vunpack.c.h.b16 %v345
        %v932 = vunpack.c.l.b16 %v346
        %v933 = vunpack.c.h.b16 %v346
        %v934 = vunpack.c.l.b16 %v347
        %v935 = vunpack.c.h.b16 %v347
        %v936 = vunpack.c.l.b16 %v348
        %v937 = vunpack.c.h.b16 %v348
        %v938 = vunpack.c.l.b16 %v349
        %v939 = vunpack.c.h.b16 %v349
        %v940 = vunpack.c.l.b16 %v350
        %v941 = vunpack.c.h.b16 %v350
        %v942 = vunpack.c.l.b16 %v351
        %v943 = vunpack.c.h.b16 %v351
        %v944 = vunpack.c.l.b16 %v352
        %v945 = vunpack.c.h.b16 %v352
        %v946 = vunpack.c.l.b16 %v353
        %v947 = vunpack.c.h.b16 %v353
        %v948 = vunpack.c.l.b16 %v354
        %v949 = vunpack.c.h.b16 %v354
        %v950 = vunpack.c.l.b16 %v355
        %v951 = vunpack.c.h.b16 %v355
        %v952 = vunpack.c.l.b16 %v356
        %v953 = vunpack.c.h.b16 %v356
        %v954 = vunpack.c.l.b16 %v357
        %v955 = vunpack.c.h.b16 %v357
        %v956 = vunpack.c.l.b16 %v358
        %v957 = vunpack.c.h.b16 %v358
        %v958 = vunpack.c.l.b16 %v359
        %v959 = vunpack.c.h.b16 %v359
        %v960 = vunpack.c.l.b16 %v360
        %v961 = vunpack.c.h.b16 %v360
        %v962 = vunpack.c.l.b16 %v361
        %v963 = vunpack.c.h.b16 %v361
        %v964 = vunpack.c.l.b16 %v362
        %v965 = vunpack.c.h.b16 %v362
        %v966 = vunpack.c.l.b16 %v363
        %v967 = vunpack.c.h.b16 %v363
        %v968 = vunpack.c.l.b16 %v364
        %v969 = vunpack.c.h.b16 %v364
        %v970 = vunpack.c.l.b16 %v365
        %v971 = vunpack.c.h.b16 %v365
        %v972 = vunpack.c.l.b16 %v366
        %v973 = vunpack.c.h.b16 %v366
        %v974 = vunpack.c.l.b16 %v367
        %v975 = vunpack.c.h.b16 %v367
        %v976 = vunpack.c.l.b16 %v368
        %v977 = vunpack.c.h.b16 %v368
        %v978 = vunpack.c.l.b16 %v369
        %v979 = vunpack.c.h.b16 %v369
        %v980 = vunpack.c.l.b16 %v370
        %v981 = vunpack.c.h.b16 %v370
        %v982 = vunpack.c.l.b16 %v371
        %v983 = vunpack.c.h.b16 %v371
        %v984 = vunpack.c.l.b16 %v372
        %v985 = vunpack.c.h.b16 %v372
        %v986 = vunpack.c.l.b16 %v373
        %v987 = vunpack.c.h.b16 %v373
        %v988 = vunpack.c.l.b16 %v374
        %v989 = vunpack.c.h.b16 %v374
        %v990 = vunpack.c.l.b16 %v375
        %v991 = vunpack.c.h.b16 %v375
        %v992 = vunpack.c.l.b16 %v376
        %v993 = vunpack.c.h.b16 %v376
        %v994 = vunpack.c.l.b16 %v377
        %v995 = vunpack.c.h.b16 %v377
        %v996 = vunpack.c.l.b16 %v378
        %v997 = vunpack.c.h.b16 %v378
        %v998 = vunpack.c.l.b16 %v379
        %v999 = vunpack.c.h.b16 %v379
        %v1000 = vunpack.c.l.b16 %v380
        %v1001 = vunpack.c.h.b16 %v380
        %v1002 = vunpack.c.l.b16 %v381
        %v1003 = vunpack.c.h.b16 %v381
        %v1004 = vunpack.c.l.b16 %v382
        %v1005 = vunpack.c.h.b16 %v382
        %v1006 = vunpack.c.l.b16 %v383
        %v1007 = vunpack.c.h.b16 %v383
        %v1008 = vunpack.c.l.b16 %v384
        %v1009 = vunpack.c.h.b16 %v384
        %v1010 = vunpack.c.l.b16 %v385
        %v1011 = vunpack.c.h.b16 %v385
        %v1012 = vunpack.c.l.b16 %v386
        %v1013 = vunpack.c.h.b16 %v386
        %v1014 = vunpack.c.l.b16 %v387
        %v1015 = vunpack.c.h.b16 %v387
        %v1016 = vunpack.c.l.b16 %v388
        %v1017 = vunpack.c.h.b16 %v388
        %v1018 = vunpack.c.l.b16 %v389
        %v1019 = vunpack.c.h.b16 %v389
        %v1020 = vunpack.c.l.b16 %v390
        %v1021 = vunpack.c.h.b16 %v390
        %v1022 = vunpack.c.l.b16 %v391
        %v1023 = vunpack.c.h.b16 %v391
        %v1024 = vunpack.c.l.b16 %v392
        %v1025 = vunpack.c.h.b16 %v392
        %v1026 = vunpack.c.l.b16 %v393
        %v1027 = vunpack.c.h.b16 %v393
        %v1028 = vunpack.c.l.b16 %v394
        %v1029 = vunpack.c.h.b16 %v394
        %v1030 = vunpack.c.l.b16 %v395
        %v1031 = vunpack.c.h.b16 %v395
        %v1032 = vunpack.c.l.b16 %v396
        %v1033 = vunpack.c.h.b16 %v396
        %v1034 = vunpack.c.l.b16 %v397
        %v1035 = vunpack.c.h.b16 %v397
        %v1036 = vunpack.c.l.b16 %v398
        %v1037 = vunpack.c.h.b16 %v398
        %v1038 = vunpack.c.l.b16 %v399
        %v1039 = vunpack.c.h.b16 %v399
        %v1040 = vunpack.c.l.b16 %v400
        %v1041 = vunpack.c.h.b16 %v400
        %v1042 = vunpack.c.l.b16 %v401
        %v1043 = vunpack.c.h.b16 %v401
        %v1044 = vunpack.c.l.b16 %v402
        %v1045 = vunpack.c.h.b16 %v402
        %v1046 = vunpack.c.l.b16 %v403
        %v1047 = vunpack.c.h.b16 %v403
        %v1048 = vunpack.c.l.b16 %v404
        %v1049 = vunpack.c.h.b16 %v404
        %v1050 = vunpack.c.l.b16 %v405
        %v1051 = vunpack.c.h.b16 %v405
        %v1052 = vunpack.c.l.b16 %v406
        %v1053 = vunpack.c.h.b16 %v406
        %v1054 = vunpack.c.l.b16 %v407
        %v1055 = vunpack.c.h.b16 %v407
        %v1056 = vunpack.c.l.b16 %v408
        %v1057 = vunpack.c.h.b16 %v408
        %v1058 = vunpack.c.l.b16 %v409
        %v1059 = vunpack.c.h.b16 %v409
        %v1060 = vunpack.c.l.b16 %v410
        %v1061 = vunpack.c.h.b16 %v410
        %v1062 = vunpack.c.l.b16 %v411
        %v1063 = vunpack.c.h.b16 %v411
        %v1064 = vunpack.c.l.b16 %v412
        %v1065 = vunpack.c.h.b16 %v412
        %v1066 = vunpack.c.l.b16 %v413
        %v1067 = vunpack.c.h.b16 %v413
        %v1068 = vunpack.c.l.b16 %v414
        %v1069 = vunpack.c.h.b16 %v414
        %v1070 = vunpack.c.l.b16 %v415
        %v1071 = vunpack.c.h.b16 %v415
        %v1072 = vunpack.c.l.b16 %v416
        %v1073 = vunpack.c.h.b16 %v416
        %v1074 = vunpack.c.l.b16 %v417
        %v1075 = vunpack.c.h.b16 %v417
        %v1076 = vunpack.c.l.b16 %v418
        %v1077 = vunpack.c.h.b16 %v418
        %v1078 = vunpack.c.l.b16 %v419
        %v1079 = vunpack.c.h.b16 %v419
        %v1080 = vunpack.c.l.b16 %v420
        %v1081 = vunpack.c.h.b16 %v420
        %v1082 = vunpack.c.l.b16 %v421
        %v1083 = vunpack.c.h.b16 %v421
        %v1084 = vunpack.c.l.b16 %v422
        %v1085 = vunpack.c.h.b16 %v422
        %v1086 = vunpack.c.l.b16 %v423
        %v1087 = vunpack.c.h.b16 %v423
        %v1088 = vunpack.c.l.b16 %v424
        %v1089 = vunpack.c.h.b16 %v424
        %v1090 = vunpack.c.l.b16 %v425
        %v1091 = vunpack.c.h.b16 %v425
        %v1092 = vunpack.c.l.b16 %v426
        %v1093 = vunpack.c.h.b16 %v426
        %v1094 = vunpack.c.l.b16 %v427
        %v1095 = vunpack.c.h.b16 %v427
        %v1096 = vunpack.c.l.b16 %v428
        %v1097 = vunpack.c.h.b16 %v428
        %v1098 = vunpack.c.l.b16 %v429
        %v1099 = vunpack.c.h.b16 %v429
        %v1100 = vunpack.c.l.b16 %v430
        %v1101 = vunpack.c.h.b16 %v430
        %v1102 = vunpack.c.l.b16 %v431
        %v1103 = vunpack.c.h.b16 %v431
        %v1104 = vunpack.c.l.b16 %v432
        %v1105 = vunpack.c.h.b16 %v432
        %v1106 = vunpack.c.l.b16 %v433
        %v1107 = vunpack.c.h.b16 %v433
        %v1108 = vunpack.c.l.b16 %v434
        %v1109 = vunpack.c.h.b16 %v434
        %v1110 = vunpack.c.l.b16 %v435
        %v1111 = vunpack.c.h.b16 %v435
        %v1112 = vunpack.c.l.b16 %v436
        %v1113 = vunpack.c.h.b16 %v436
        %v1114 = vunpack.c.l.b16 %v437
        %v1115 = vunpack.c.h.b16 %v437
        %v1116 = vunpack.c.l.b16 %v438
        %v1117 = vunpack.c.h.b16 %v438
        %v1118 = vunpack.c.l.b16 %v439
        %v1119 = vunpack.c.h.b16 %v439
        %v1120 = vunpack.c.l.b16 %v440
        %v1121 = vunpack.c.h.b16 %v440
        %v1122 = vunpack.c.l.b16 %v441
        %v1123 = vunpack.c.h.b16 %v441
        %v1124 = vunpack.c.l.b16 %v442
        %v1125 = vunpack.c.h.b16 %v442
        %v1126 = vunpack.c.l.b16 %v443
        %v1127 = vunpack.c.h.b16 %v443
        %v1128 = vunpack.c.l.b16 %v444
        %v1129 = vunpack.c.h.b16 %v444
        %v1130 = vunpack.c.l.b16 %v445
        %v1131 = vunpack.c.h.b16 %v445
        %v1132 = vunpack.c.l.b16 %v446
        %v1133 = vunpack.c.h.b16 %v446
        %v1134 = vunpack.c.l.b16 %v447
        %v1135 = vunpack.c.h.b16 %v447
        %v1136 = vunpack.c.l.b16 %v448
        %v1137 = vunpack.c.h.b16 %v448
        %v1138 = vunpack.c.l.b16 %v449
        %v1139 = vunpack.c.h.b16 %v449
        %v1140 = vunpack.c.l.b16 %v450
        %v1141 = vunpack.c.h.b16 %v450
        %v1142 = vunpack.c.l.b16 %v451
        %v1143 = vunpack.c.h.b16 %v451
        %v1144 = vunpack.c.l.b16 %v452
        %v1145 = vunpack.c.h.b16 %v452
        %v1146 = vunpack.c.l.b16 %v453
        %v1147 = vunpack.c.h.b16 %v453
        %v1148 = vunpack.c.l.b16 %v454
        %v1149 = vunpack.c.h.b16 %v454
        %v1150 = vunpack.c.l.b16 %v455
        %v1151 = vunpack.c.h.b16 %v455
        %v1152 = vunpack.c.l.b16 %v456
        %v1153 = vunpack.c.h.b16 %v456
        %v1154 = vunpack.c.l.b16 %v457
        %v1155 = vunpack.c.h.b16 %v457
        %v1156 = vunpack.c.l.b16 %v458
        %v1157 = vunpack.c.h.b16 %v458
        %v1158 = vunpack.c.l.b16 %v459
        %v1159 = vunpack.c.h.b16 %v459
        %v1160 = vunpack.c.l.b16 %v460
        %v1161 = vunpack.c.h.b16 %v460
        %v1162 = vunpack.c.l.b16 %v461
        %v1163 = vunpack.c.h.b16 %v461
        %v1164 = vunpack.c.l.b16 %v462
        %v1165 = vunpack.c.h.b16 %v462
        %v1166 = vunpack.c.l.b16 %v463
        %v1167 = vunpack.c.h.b16 %v463
        %v1168 = vunpack.c.l.b16 %v464
        %v1169 = vunpack.c.h.b16 %v464
        %v1170 = vunpack.c.l.b16 %v465
        %v1171 = vunpack.c.h.b16 %v465
        %v1172 = vunpack.c.l.b16 %v466
        %v1173 = vunpack.c.h.b16 %v466
        %v1174 = vunpack.c.l.b16 %v467
        %v1175 = vunpack.c.h.b16 %v467
        %v1176 = vunpack.c.l.b16 %v468
        %v1177 = vunpack.c.h.b16 %v468
        %v1178 = vunpack.c.l.b16 %v469
        %v1179 = vunpack.c.h.b16 %v469
        %v1180 = vunpack.c.l.b16 %v470
        %v1181 = vunpack.c.h.b16 %v470
        %v1182 = vunpack.c.l.b16 %v471
        %v1183 = vunpack.c.h.b16 %v471
        %v1184 = vunpack.c.l.b16 %v472
        %v1185 = vunpack.c.h.b16 %v472
        %v1186 = vunpack.c.l.b16 %v473
        %v1187 = vunpack.c.h.b16 %v473
        %v1188 = vunpack.c.l.b16 %v474
        %v1189 = vunpack.c.h.b16 %v474
        %v1190 = vunpack.c.l.b16 %v475
        %v1191 = vunpack.c.h.b16 %v475
        %v1192 = vpack.c.b16 %v778, %v776
        %v1193 = vpack.c.b16 %v779, %v777
        %v1194 = vpack.c.b16 %v782, %v780
        %v1195 = vpack.c.b16 %v783, %v781
        %v1196 = vpack.c.b16 %v786, %v784
        %v1197 = vpack.c.b16 %v787, %v785
        %v1198 = vpack.c.b16 %v790, %v788
        %v1199 = vpack.c.b16 %v791, %v789
        %v1200 = vpack.c.b16 %v794, %v792
        %v1201 = vpack.c.b16 %v795, %v793
        %v1202 = vpack.c.b16 %v798, %v796
        %v1203 = vpack.c.b16 %v799, %v797
        %v1204 = vpack.c.b16 %v802, %v800
        %v1205 = vpack.c.b16 %v803, %v801
        %v1206 = vpack.c.b16 %v806, %v804
        %v1207 = vpack.c.b16 %v807, %v805
        %v1208 = vpack.c.b16 %v810, %v808
        %v1209 = vpack.c.b16 %v811, %v809
        %v1210 = vpack.c.b16 %v814, %v812
        %v1211 = vpack.c.b16 %v815, %v813
        %v1212 = vpack.c.b16 %v818, %v816
        %v1213 = vpack.c.b16 %v819, %v817
        %v1214 = vpack.c.b16 %v822, %v820
        %v1215 = vpack.c.b16 %v823, %v821
        %v1216 = vpack.c.b16 %v826, %v824
        %v1217 = vpack.c.b16 %v827, %v825
        %v1218 = vpack.c.b16 %v830, %v828
        %v1219 = vpack.c.b16 %v831, %v829
        %v1220 = vpack.c.b16 %v834, %v832
        %v1221 = vpack.c.b16 %v835, %v833
        %v1222 = vpack.c.b16 %v838, %v836
        %v1223 = vpack.c.b16 %v839, %v837
        %v1224 = vpack.c.b16 %v842, %v840
        %v1225 = vpack.c.b16 %v843, %v841
        %v1226 = vpack.c.b16 %v846, %v844
        %v1227 = vpack.c.b16 %v847, %v845
        %v1228 = vpack.c.b16 %v850, %v848
        %v1229 = vpack.c.b16 %v851, %v849
        %v1230 = vpack.c.b16 %v854, %v852
        %v1231 = vpack.c.b16 %v855, %v853
        %v1232 = vpack.c.b16 %v858, %v856
        %v1233 = vpack.c.b16 %v859, %v857
        %v1234 = vpack.c.b16 %v862, %v860
        %v1235 = vpack.c.b16 %v863, %v861
        %v1236 = vpack.c.b16 %v866, %v864
        %v1237 = vpack.c.b16 %v867, %v865
        %v1238 = vpack.c.b16 %v870, %v868
        %v1239 = vpack.c.b16 %v871, %v869
        %v1240 = vpack.c.b16 %v874, %v872
        %v1241 = vpack.c.b16 %v875, %v873
        %v1242 = vpack.c.b16 %v878, %v876
        %v1243 = vpack.c.b16 %v879, %v877
        %v1244 = vpack.c.b16 %v882, %v880
        %v1245 = vpack.c.b16 %v883, %v881
        %v1246 = vpack.c.b16 %v886, %v884
        %v1247 = vpack.c.b16 %v887, %v885
        %v1248 = vpack.c.b16 %v890, %v888
        %v1249 = vpack.c.b16 %v891, %v889
        %v1250 = vpack.c.b16 %v894, %v892
        %v1251 = vpack.c.b16 %v895, %v893
        %v1252 = vpack.c.b16 %v898, %v896
        %v1253 = vpack.c.b16 %v899, %v897
        %v1254 = vpack.c.b16 %v902, %v900
        %v1255 = vpack.c.b16 %v903, %v901
        %v1256 = vpack.c.b16 %v906, %v904
        %v1257 = vpack.c.b16 %v907, %v905
        %v1258 = vpack.c.b16 %v910, %v908
        %v1259 = vpack.c.b16 %v911, %v909
        %v1260 = vpack.c.b16 %v914, %v912
        %v1261 = vpack.c.b16 %v915, %v913
        %v1262 = vpack.c.b16 %v918, %v916
        %v1263 = vpack.c.b16 %v919, %v917
        %v1264 = vpack.c.b16 %v922, %v920
        %v1265 = vpack.c.b16 %v923, %v921
        %v1266 = vpack.c.b16 %v926, %v924
        %v1267 = vpack.c.b16 %v927, %v925
        %v1268 = vpack.c.b16 %v930, %v928
        %v1269 = vpack.c.b16 %v931, %v929
        %v1270 = vpack.c.b16 %v934, %v932
        %v1271 = vpack.c.b16 %v935, %v933
        %v1272 = vpack.c.b16 %v938, %v936
        %v1273 = vpack.c.b16 %v939, %v937
        %v1274 = vpack.c.b16 %v942, %v940
        %v1275 = vpack.c.b16 %v943, %v941
        %v1276 = vpack.c.b16 %v946, %v944
        %v1277 = vpack.c.b16 %v947, %v945
        %v1278 = vpack.c.b16 %v950, %v948
        %v1279 = vpack.c.b16 %v951, %v949
        %v1280 = vpack.c.b16 %v954, %v952
        %v1281 = vpack.c.b16 %v955, %v953
        %v1282 = vpack.c.b16 %v958, %v956
        %v1283 = vpack.c.b16 %v959, %v957
        %v1284 = vpack.c.b16 %v962, %v960
        %v1285 = vpack.c.b16 %v963, %v961
        %v1286 = vpack.c.b16 %v966, %v964
        %v1287 = vpack.c.b16 %v967, %v965
        %v1288 = vpack.c.b16 %v970, %v968
        %v1289 = vpack.c.b16 %v971, %v969
        %v1290 = vpack.c.b16 %v974, %v972
        %v1291 = vpack.c.b16 %v975, %v973
        %v1292 = vpack.c.b16 %v978, %v976
        %v1293 = vpack.c.b16 %v979, %v977
        %v1294 = vpack.c.b16 %v982, %v980
        %v1295 = vpack.c.b16 %v983, %v981
        %v1296 = vpack.c.b16 %v986, %v984
        %v1297 = vpack.c.b16 %v987, %v985
        %v1298 = vpack.c.b16 %v990, %v988
        %v1299 = vpack.c.b16 %v991, %v989
        %v1300 = vpack.c.b16 %v994, %v992
        %v1301 = vpack.c.b16 %v995, %v993
        %v1302 = vpack.c.b16 %v998, %v996
        %v1303 = vpack.c.b16 %v999, %v997
        %v1304 = vpack.c.b16 %v1002, %v1000
        %v1305 = vpack.c.b16 %v1003, %v1001
        %v1306 = vpack.c.b16 %v1006, %v1004
        %v1307 = vpack.c.b16 %v1007, %v1005
        %v1308 = vpack.c.b16 %v1010, %v1008
        %v1309 = vpack.c.b16 %v1011, %v1009
        %v1310 = vpack.c.b16 %v1014, %v1012
        %v1311 = vpack.c.b16 %v1015, %v1013
        %v1312 = vpack.c.b16 %v1018, %v1016
        %v1313 = vpack.c.b16 %v1019, %v1017
        %v1314 = vpack.c.b16 %v1022, %v1020
        %v1315 = vpack.c.b16 %v1023, %v1021
        %v1316 = vpack.c.b16 %v1026, %v1024
        %v1317 = vpack.c.b16 %v1027, %v1025
        %v1318 = vpack.c.b16 %v1030, %v1028
        %v1319 = vpack.c.b16 %v1031, %v1029
        %v1320 = vpack.c.b16 %v1034, %v1032
        %v1321 = vpack.c.b16 %v1035, %v1033
        %v1322 = vpack.c.b16 %v1038, %v1036
        %v1323 = vpack.c.b16 %v1039, %v1037
        %v1324 = vpack.c.b16 %v1042, %v1040
        %v1325 = vpack.c.b16 %v1043, %v1041
        %v1326 = vpack.c.b16 %v1046, %v1044
        %v1327 = vpack.c.b16 %v1047, %v1045
        %v1328 = vpack.c.b16 %v1050, %v1048
        %v1329 = vpack.c.b16 %v1051, %v1049
        %v1330 = vpack.c.b16 %v1054, %v1052
        %v1331 = vpack.c.b16 %v1055, %v1053
        %v1332 = vpack.c.b16 %v1058, %v1056
        %v1333 = vpack.c.b16 %v1059, %v1057
        %v1334 = vpack.c.b16 %v1062, %v1060
        %v1335 = vpack.c.b16 %v1063, %v1061
        %v1336 = vpack.c.b16 %v1066, %v1064
        %v1337 = vpack.c.b16 %v1067, %v1065
        %v1338 = vpack.c.b16 %v1070, %v1068
        %v1339 = vpack.c.b16 %v1071, %v1069
        %v1340 = vpack.c.b16 %v1074, %v1072
        %v1341 = vpack.c.b16 %v1075, %v1073
        %v1342 = vpack.c.b16 %v1078, %v1076
        %v1343 = vpack.c.b16 %v1079, %v1077
        %v1344 = vpack.c.b16 %v1082, %v1080
        %v1345 = vpack.c.b16 %v1083, %v1081
        %v1346 = vpack.c.b16 %v1086, %v1084
        %v1347 = vpack.c.b16 %v1087, %v1085
        %v1348 = vpack.c.b16 %v1090, %v1088
        %v1349 = vpack.c.b16 %v1091, %v1089
        %v1350 = vpack.c.b16 %v1094, %v1092
        %v1351 = vpack.c.b16 %v1095, %v1093
        %v1352 = vpack.c.b16 %v1098, %v1096
        %v1353 = vpack.c.b16 %v1099, %v1097
        %v1354 = vpack.c.b16 %v1102, %v1100
        %v1355 = vpack.c.b16 %v1103, %v1101
        %v1356 = vpack.c.b16 %v1106, %v1104
        %v1357 = vpack.c.b16 %v1107, %v1105
        %v1358 = vpack.c.b16 %v1110, %v1108
        %v1359 = vpack.c.b16 %v1111, %v1109
        %v1360 = vpack.c.b16 %v1114, %v1112
        %v1361 = vpack.c.b16 %v1115, %v1113
        %v1362 = vpack.c.b16 %v1118, %v1116
        %v1363 = vpack.c.b16 %v1119, %v1117
        %v1364 = vpack.c.b16 %v1122, %v1120
        %v1365 = vpack.c.b16 %v1123, %v1121
        %v1366 = vpack.c.b16 %v1126, %v1124
        %v1367 = vpack.c.b16 %v1127, %v1125
        %v1368 = vpack.c.b16 %v1130, %v1128
        %v1369 = vpack.c.b16 %v1131, %v1129
        %v1370 = vpack.c.b16 %v1134, %v1132
        %v1371 = vpack.c.b16 %v1135, %v1133
        %v1372 = vpack.c.b16 %v1138, %v1136
        %v1373 = vpack.c.b16 %v1139, %v1137
        %v1374 = vpack.c.b16 %v1142, %v1140
        %v1375 = vpack.c.b16 %v1143, %v1141
        %v1376 = vpack.c.b16 %v1146, %v1144
        %v1377 = vpack.c.b16 %v1147, %v1145
        %v1378 = vpack.c.b16 %v1150, %v1148
        %v1379 = vpack.c.b16 %v1151, %v1149
        %v1380 = vpack.c.b16 %v1154, %v1152
        %v1381 = vpack.c.b16 %v1155, %v1153
        %v1382 = vpack.c.b16 %v1158, %v1156
        %v1383 = vpack.c.b16 %v1159, %v1157
        %v1384 = vpack.c.b16 %v1162, %v1160
        %v1385 = vpack.c.b16 %v1163, %v1161
        %v1386 = vpack.c.b16 %v1166, %v1164
        %v1387 = vpack.c.b16 %v1167, %v1165
        %v1388 = vpack.c.b16 %v1170, %v1168
        %v1389 = vpack.c.b16 %v1171, %v1169
        %v1390 = vpack.c.b16 %v1174, %v1172
        %v1391 = vpack.c.b16 %v1175, %v1173
        %v1392 = vpack.c.b16 %v1178, %v1176
        %v1393 = vpack.c.b16 %v1179, %v1177
        %v1394 = vpack.c.b16 %v1182, %v1180
        %v1395 = vpack.c.b16 %v1183, %v1181
        %v1396 = vpack.c.b16 %v1186, %v1184
        %v1397 = vpack.c.b16 %v1187, %v1185
        %v1398 = vpack.c.b16 %v1190, %v1188
        %v1399 = vpack.c.b16 %v1191, %v1189
        %1608 = vmatprep.subr.bf16.mxu0 %v1193
        %1609 = vmatpush1.bf16.msra.mxu0 %v1192
        %1610 = vmatprep.subr.bf16.mxu0 %v1195
        %1611 = vmatpush1.bf16.msra.mxu0 %v1194
        %1612 = vmatprep.subr.bf16.mxu0 %v1197
        %1613 = vmatpush1.bf16.msra.mxu0 %v1196
        %1614 = vmatprep.subr.bf16.mxu0 %v1199
        %1615 = vmatpush1.bf16.msra.mxu0 %v1198
        %1616 = vmatprep.subr.bf16.mxu0 %v1201
        %1617 = vmatpush1.bf16.msra.mxu0 %v1200
        %1618 = vmatprep.subr.bf16.mxu0 %v1203
        %1619 = vmatpush1.bf16.msra.mxu0 %v1202
        %1620 = vmatprep.subr.bf16.mxu0 %v1205
        %1621 = vmatpush1.bf16.msra.mxu0 %v1204
        %1622 = vmatprep.subr.bf16.mxu0 %v1207
        %1623 = vmatpush1.bf16.msra.mxu0 %v1206
        %1624 = vmatprep.subr.bf16.mxu0 %v1209
        %1625 = vmatpush1.bf16.msra.mxu0 %v1208
        %1626 = vmatprep.subr.bf16.mxu0 %v1211
        %1627 = vmatpush1.bf16.msra.mxu0 %v1210
        %1628 = vmatprep.subr.bf16.mxu0 %v1213
        %1629 = vmatpush1.bf16.msra.mxu0 %v1212
        %1630 = vmatprep.subr.bf16.mxu0 %v1215
        %1631 = vmatpush1.bf16.msra.mxu0 %v1214
        %1632 = vmatprep.subr.bf16.mxu0 %v1217
        %1633 = vmatpush1.bf16.msra.mxu0 %v1216
        %1634 = vmatprep.subr.bf16.mxu0 %v1219
        %1635 = vmatpush1.bf16.msra.mxu0 %v1218
        %1636 = vmatprep.subr.bf16.mxu0 %v1221
        %1637 = vmatpush1.bf16.msra.mxu0 %v1220
        %1638 = vmatprep.subr.bf16.mxu0 %v1223
        %1639 = vmatpush1.bf16.msra.mxu0 %v1222
        %1640 = vmatprep.mubr.bf16.mxu0 %v543
        %1641 = vmatmul.mubr.bf16.gmra.mrb[0].mxu0 %v542
        %v1642 = vpop.f32.mrb[0].mxu0
        %v1643 = vadd.f32 %v495, %v1642
        %v1644 = vpop.f32.mrb[0].mxu0
        %v1645 = vadd.f32 %v499, %v1644
        %v1646 = vpop.f32.mrb[0].mxu0
        %v1647 = vadd.f32 %v495, %v1646
        %v1648 = vpop.f32.mrb[0].mxu0
        %v1649 = vadd.f32 %v499, %v1648
        %1650 = vdwg.mxu0
        %1651 = vmatprep.subr.bf16.mxu0 %v1225
        %1652 = vmatpush1.bf16.msra.mxu0 %v1224
        %1653 = vmatprep.subr.bf16.mxu0 %v1227
        %1654 = vmatpush1.bf16.msra.mxu0 %v1226
        %1655 = vmatprep.subr.bf16.mxu0 %v1229
        %1656 = vmatpush1.bf16.msra.mxu0 %v1228
        %1657 = vmatprep.subr.bf16.mxu0 %v1231
        %1658 = vmatpush1.bf16.msra.mxu0 %v1230
        %1659 = vmatprep.subr.bf16.mxu0 %v1233
        %1660 = vmatpush1.bf16.msra.mxu0 %v1232
        %1661 = vmatprep.subr.bf16.mxu0 %v1235
        %1662 = vmatpush1.bf16.msra.mxu0 %v1234
        %1663 = vmatprep.subr.bf16.mxu0 %v1237
        %1664 = vmatpush1.bf16.msra.mxu0 %v1236
        %1665 = vmatprep.subr.bf16.mxu0 %v1239
        %1666 = vmatpush1.bf16.msra.mxu0 %v1238
        %1667 = vmatprep.subr.bf16.mxu0 %v1241
        %1668 = vmatpush1.bf16.msra.mxu0 %v1240
        %1669 = vmatprep.subr.bf16.mxu0 %v1243
        %1670 = vmatpush1.bf16.msra.mxu0 %v1242
        %1671 = vmatprep.subr.bf16.mxu0 %v1245
        %1672 = vmatpush1.bf16.msra.mxu0 %v1244
        %1673 = vmatprep.subr.bf16.mxu0 %v1247
        %1674 = vmatpush1.bf16.msra.mxu0 %v1246
        %1675 = vmatprep.subr.bf16.mxu0 %v1249
        %1676 = vmatpush1.bf16.msra.mxu0 %v1248
        %1677 = vmatprep.subr.bf16.mxu0 %v1251
        %1678 = vmatpush1.bf16.msra.mxu0 %v1250
        %1679 = vmatprep.subr.bf16.mxu0 %v1253
        %1680 = vmatpush1.bf16.msra.mxu0 %v1252
        %1681 = vmatprep.subr.bf16.mxu0 %v1255
        %1682 = vmatpush1.bf16.msra.mxu0 %v1254
        %1683 = vmatprep.mubr.bf16.mxu0 %v545
        %1684 = vmatmul.mubr.bf16.gmra.mrb[0].mxu0 %v544
        %v1685 = vpop.f32.mrb[0].mxu0
        %v1686 = vadd.f32 %v1643, %v1685
        %v1687 = vpop.f32.mrb[0].mxu0
        %v1688 = vadd.f32 %v1645, %v1687
        %v1689 = vpop.f32.mrb[0].mxu0
        %v1690 = vadd.f32 %v1647, %v1689
        %v1691 = vpop.f32.mrb[0].mxu0
        %v1692 = vadd.f32 %v1649, %v1691
        %1693 = vdwg.mxu0
        %1694 = vmatprep.subr.bf16.mxu0 %v1257
        %1695 = vmatpush1.bf16.msra.mxu0 %v1256
        %1696 = vmatprep.subr.bf16.mxu0 %v1259
        %1697 = vmatpush1.bf16.msra.mxu0 %v1258
        %1698 = vmatprep.subr.bf16.mxu0 %v1261
        %1699 = vmatpush1.bf16.msra.mxu0 %v1260
        %1700 = vmatprep.subr.bf16.mxu0 %v1263
        %1701 = vmatpush1.bf16.msra.mxu0 %v1262
        %1702 = vmatprep.subr.bf16.mxu0 %v1265
        %1703 = vmatpush1.bf16.msra.mxu0 %v1264
        %1704 = vmatprep.subr.bf16.mxu0 %v1267
        %1705 = vmatpush1.bf16.msra.mxu0 %v1266
        %1706 = vmatprep.subr.bf16.mxu0 %v1269
        %1707 = vmatpush1.bf16.msra.mxu0 %v1268
        %1708 = vmatprep.subr.bf16.mxu0 %v1271
        %1709 = vmatpush1.bf16.msra.mxu0 %v1270
        %1710 = vmatprep.subr.bf16.mxu0 %v1273
        %1711 = vmatpush1.bf16.msra.mxu0 %v1272
        %1712 = vmatprep.subr.bf16.mxu0 %v1275
        %1713 = vmatpush1.bf16.msra.mxu0 %v1274
        %1714 = vmatprep.subr.bf16.mxu0 %v1277
        %1715 = vmatpush1.bf16.msra.mxu0 %v1276
        %1716 = vmatprep.subr.bf16.mxu0 %v1279
        %1717 = vmatpush1.bf16.msra.mxu0 %v1278
        %1718 = vmatprep.subr.bf16.mxu0 %v1281
        %1719 = vmatpush1.bf16.msra.mxu0 %v1280
        %1720 = vmatprep.subr.bf16.mxu0 %v1283
        %1721 = vmatpush1.bf16.msra.mxu0 %v1282
        %1722 = vmatprep.subr.bf16.mxu0 %v1285
        %1723 = vmatpush1.bf16.msra.mxu0 %v1284
        %1724 = vmatprep.subr.bf16.mxu0 %v1287
        %1725 = vmatpush1.bf16.msra.mxu0 %v1286
        %1726 = vmatprep.mubr.bf16.mxu0 %v547
        %1727 = vmatmul.mubr.bf16.gmra.mrb[0].mxu0 %v546
        %v1728 = vpop.f32.mrb[0].mxu0
        %v1729 = vadd.f32 %v1686, %v1728
        %v1730 = vpop.f32.mrb[0].mxu0
        %v1731 = vadd.f32 %v1688, %v1730
        %v1732 = vpop.f32.mrb[0].mxu0
        %v1733 = vadd.f32 %v1690, %v1732
        %v1734 = vpop.f32.mrb[0].mxu0
        %v1735 = vadd.f32 %v1692, %v1734
        %1736 = vdwg.mxu0
        %1737 = vmatprep.subr.bf16.mxu0 %v1289
        %1738 = vmatpush1.bf16.msra.mxu0 %v1288
        %1739 = vmatprep.subr.bf16.mxu0 %v1291
        %1740 = vmatpush1.bf16.msra.mxu0 %v1290
        %1741 = vmatprep.subr.bf16.mxu0 %v1293
        %1742 = vmatpush1.bf16.msra.mxu0 %v1292
        %1743 = vmatprep.subr.bf16.mxu0 %v1295
        %1744 = vmatpush1.bf16.msra.mxu0 %v1294
        %1745 = vmatprep.subr.bf16.mxu0 %v1297
        %1746 = vmatpush1.bf16.msra.mxu0 %v1296
        %1747 = vmatprep.subr.bf16.mxu0 %v1299
        %1748 = vmatpush1.bf16.msra.mxu0 %v1298
        %1749 = vmatprep.subr.bf16.mxu0 %v1301
        %1750 = vmatpush1.bf16.msra.mxu0 %v1300
        %1751 = vmatprep.subr.bf16.mxu0 %v1303
        %1752 = vmatpush1.bf16.msra.mxu0 %v1302
        %1753 = vmatprep.subr.bf16.mxu0 %v1305
        %1754 = vmatpush1.bf16.msra.mxu0 %v1304
        %1755 = vmatprep.subr.bf16.mxu0 %v1307
        %1756 = vmatpush1.bf16.msra.mxu0 %v1306
        %1757 = vmatprep.subr.bf16.mxu0 %v1309
        %1758 = vmatpush1.bf16.msra.mxu0 %v1308
        %1759 = vmatprep.subr.bf16.mxu0 %v1311
        %1760 = vmatpush1.bf16.msra.mxu0 %v1310
        %1761 = vmatprep.subr.bf16.mxu0 %v1313
        %1762 = vmatpush1.bf16.msra.mxu0 %v1312
        %1763 = vmatprep.subr.bf16.mxu0 %v1315
        %1764 = vmatpush1.bf16.msra.mxu0 %v1314
        %1765 = vmatprep.subr.bf16.mxu0 %v1317
        %1766 = vmatpush1.bf16.msra.mxu0 %v1316
        %1767 = vmatprep.subr.bf16.mxu0 %v1319
        %1768 = vmatpush1.bf16.msra.mxu0 %v1318
        %1769 = vmatprep.mubr.bf16.mxu0 %v549
        %1770 = vmatmul.mubr.bf16.gmra.mrb[0].mxu0 %v548
        %v1771 = vpop.f32.mrb[0].mxu0
        %v1772 = vadd.f32 %v1729, %v1771
        %v1773 = vpop.f32.mrb[0].mxu0
        %v1774 = vadd.f32 %v1731, %v1773
        %v1775 = vpop.f32.mrb[0].mxu0
        %v1776 = vadd.f32 %v1733, %v1775
        %v1777 = vpop.f32.mrb[0].mxu0
        %v1778 = vadd.f32 %v1735, %v1777
        %1779 = vdwg.mxu0
        %1780 = vmatprep.subr.bf16.mxu0 %v1321
        %1781 = vmatpush1.bf16.msra.mxu0 %v1320
        %1782 = vmatprep.subr.bf16.mxu0 %v1323
        %1783 = vmatpush1.bf16.msra.mxu0 %v1322
        %1784 = vmatprep.subr.bf16.mxu0 %v1325
        %1785 = vmatpush1.bf16.msra.mxu0 %v1324
        %1786 = vmatprep.subr.bf16.mxu0 %v1327
        %1787 = vmatpush1.bf16.msra.mxu0 %v1326
        %1788 = vmatprep.subr.bf16.mxu0 %v1329
        %1789 = vmatpush1.bf16.msra.mxu0 %v1328
        %1790 = vmatprep.subr.bf16.mxu0 %v1331
        %1791 = vmatpush1.bf16.msra.mxu0 %v1330
        %1792 = vmatprep.subr.bf16.mxu0 %v1333
        %1793 = vmatpush1.bf16.msra.mxu0 %v1332
        %1794 = vmatprep.subr.bf16.mxu0 %v1335
        %1795 = vmatpush1.bf16.msra.mxu0 %v1334
        %1796 = vmatprep.subr.bf16.mxu0 %v1337
        %1797 = vmatpush1.bf16.msra.mxu0 %v1336
        %1798 = vmatprep.subr.bf16.mxu0 %v1339
        %1799 = vmatpush1.bf16.msra.mxu0 %v1338
        %1800 = vmatprep.subr.bf16.mxu0 %v1341
        %1801 = vmatpush1.bf16.msra.mxu0 %v1340
        %1802 = vmatprep.subr.bf16.mxu0 %v1343
        %1803 = vmatpush1.bf16.msra.mxu0 %v1342
        %1804 = vmatprep.subr.bf16.mxu0 %v1345
        %1805 = vmatpush1.bf16.msra.mxu0 %v1344
        %1806 = vmatprep.subr.bf16.mxu0 %v1347
        %1807 = vmatpush1.bf16.msra.mxu0 %v1346
        %1808 = vmatprep.subr.bf16.mxu0 %v1349
        %1809 = vmatpush1.bf16.msra.mxu0 %v1348
        %1810 = vmatprep.subr.bf16.mxu0 %v1351
        %1811 = vmatpush1.bf16.msra.mxu0 %v1350
        %1812 = vmatprep.mubr.bf16.mxu0 %v551
        %1813 = vmatmul.mubr.bf16.gmra.mrb[0].mxu0 %v550
        %v1814 = vpop.f32.mrb[0].mxu0
        %v1815 = vadd.f32 %v1772, %v1814
        %v1816 = vpop.f32.mrb[0].mxu0
        %v1817 = vadd.f32 %v1774, %v1816
        %v1818 = vpop.f32.mrb[0].mxu0
        %v1819 = vadd.f32 %v1776, %v1818
        %v1820 = vpop.f32.mrb[0].mxu0
        %v1821 = vadd.f32 %v1778, %v1820
        %1822 = vdwg.mxu0
        %1823 = vmatprep.subr.bf16.mxu0 %v1353
        %1824 = vmatpush1.bf16.msra.mxu0 %v1352
        %1825 = vmatprep.subr.bf16.mxu0 %v1355
        %1826 = vmatpush1.bf16.msra.mxu0 %v1354
        %1827 = vmatprep.subr.bf16.mxu0 %v1357
        %1828 = vmatpush1.bf16.msra.mxu0 %v1356
        %1829 = vmatprep.subr.bf16.mxu0 %v1359
        %1830 = vmatpush1.bf16.msra.mxu0 %v1358
        %1831 = vmatprep.subr.bf16.mxu0 %v1361
        %1832 = vmatpush1.bf16.msra.mxu0 %v1360
        %1833 = vmatprep.subr.bf16.mxu0 %v1363
        %1834 = vmatpush1.bf16.msra.mxu0 %v1362
        %1835 = vmatprep.subr.bf16.mxu0 %v1365
        %1836 = vmatpush1.bf16.msra.mxu0 %v1364
        %1837 = vmatprep.subr.bf16.mxu0 %v1367
        %1838 = vmatpush1.bf16.msra.mxu0 %v1366
        %1839 = vmatprep.subr.bf16.mxu0 %v1369
        %1840 = vmatpush1.bf16.msra.mxu0 %v1368
        %1841 = vmatprep.subr.bf16.mxu0 %v1371
        %1842 = vmatpush1.bf16.msra.mxu0 %v1370
        %1843 = vmatprep.subr.bf16.mxu0 %v1373
        %1844 = vmatpush1.bf16.msra.mxu0 %v1372
        %1845 = vmatprep.subr.bf16.mxu0 %v1375
        %1846 = vmatpush1.bf16.msra.mxu0 %v1374
        %1847 = vmatprep.subr.bf16.mxu0 %v1377
        %1848 = vmatpush1.bf16.msra.mxu0 %v1376
        %1849 = vmatprep.subr.bf16.mxu0 %v1379
        %1850 = vmatpush1.bf16.msra.mxu0 %v1378
        %1851 = vmatprep.subr.bf16.mxu0 %v1381
        %1852 = vmatpush1.bf16.msra.mxu0 %v1380
        %1853 = vmatprep.subr.bf16.mxu0 %v1383
        %1854 = vmatpush1.bf16.msra.mxu0 %v1382
        %1855 = vmatprep.mubr.bf16.mxu0 %v553
        %1856 = vmatmul.mubr.bf16.gmra.mrb[0].mxu0 %v552
        %v1857 = vpop.f32.mrb[0].mxu0
        %v1858 = vadd.f32 %v1815, %v1857
        %v1859 = vpop.f32.mrb[0].mxu0
        %v1860 = vadd.f32 %v1817, %v1859
        %v1861 = vpop.f32.mrb[0].mxu0
        %v1862 = vadd.f32 %v1819, %v1861
        %v1863 = vpop.f32.mrb[0].mxu0
        %v1864 = vadd.f32 %v1821, %v1863
        %1865 = vdwg.mxu0
        %1866 = vmatprep.subr.bf16.mxu0 %v1385
        %1867 = vmatpush1.bf16.msra.mxu0 %v1384
        %1868 = vmatprep.subr.bf16.mxu0 %v1387
        %1869 = vmatpush1.bf16.msra.mxu0 %v1386
        %1870 = vmatprep.subr.bf16.mxu0 %v1389
        %1871 = vmatpush1.bf16.msra.mxu0 %v1388
        %1872 = vmatprep.subr.bf16.mxu0 %v1391
        %1873 = vmatpush1.bf16.msra.mxu0 %v1390
        %1874 = vmatprep.subr.bf16.mxu0 %v1393
        %1875 = vmatpush1.bf16.msra.mxu0 %v1392
        %1876 = vmatprep.subr.bf16.mxu0 %v1395
        %1877 = vmatpush1.bf16.msra.mxu0 %v1394
        %1878 = vmatprep.subr.bf16.mxu0 %v1397
        %1879 = vmatpush1.bf16.msra.mxu0 %v1396
        %1880 = vmatprep.subr.bf16.mxu0 %v1399
        %1881 = vmatpush1.bf16.msra.mxu0 %v1398
        %1882 = vmatprep.subr.bf16.mxu0 0
        %1883 = vmatpush1.bf16.msra.mxu0 0
        %1884 = vmatprep.subr.bf16.mxu0 0
        %1885 = vmatpush1.bf16.msra.mxu0 0
        %1886 = vmatprep.subr.bf16.mxu0 0
        %1887 = vmatpush1.bf16.msra.mxu0 0
        %1888 = vmatprep.subr.bf16.mxu0 0
        %1889 = vmatpush1.bf16.msra.mxu0 0
        %1890 = vmatprep.subr.bf16.mxu0 0
        %1891 = vmatpush1.bf16.msra.mxu0 0
        %1892 = vmatprep.subr.bf16.mxu0 0
        %1893 = vmatpush1.bf16.msra.mxu0 0
        %1894 = vmatprep.subr.bf16.mxu0 0
        %1895 = vmatpush1.bf16.msra.mxu0 0
        %1896 = vmatprep.subr.bf16.mxu0 0
        %1897 = vmatpush1.bf16.msra.mxu0 0
        %1898 = vmatprep.mubr.bf16.mxu0 0
        %1899 = vmatmul.mubr.bf16.gmra.mrb[0].mxu0 %v554
        %v1900 = vpop.f32.mrb[0].mxu0
        %v1901 = vadd.f32 %v1858, %v1900
        %v1902 = vpop.f32.mrb[0].mxu0
        %v1903 = vadd.f32 %v1860, %v1902
        %v1904 = vpop.f32.mrb[0].mxu0
        %v1905 = vadd.f32 %v1862, %v1904
        %v1906 = vpop.f32.mrb[0].mxu0
        %v1907 = vadd.f32 %v1864, %v1906
        %1908 = vdwg.mxu0
        %v1909 = vmax.f32 %v1901, 0.0
        %v1910 = vmax.f32 %v1903, 0.0
        %v1911 = vmax.f32 %v1905, 0.0
        %v1912 = vmax.f32 %v1907, 0.0
        %v1913 = vpack.c.bf16 %v1911, %v1909
        %v1914 = vpack.c.bf16 %v1912, %v1910
        %v1917 = vunpack.c.l.b16 %v1913
        %v1918 = vunpack.c.l.b16 %v1914
        %v1919 = vunpack.c.h.b16 %v1913
        %v1920 = vunpack.c.h.b16 %v1914
        %v1921 = vpack.c.b16 %v1918, %v1917
        %v1922 = vpack.c.b16 %v1920, %v1919
        %1925 = vst [vmem:[%s261] sm:$0xff] %v1921
        %1926 = vst [vmem:[%s261 + $0x8] sm:$0xff] %v1922
        %s1927 = sand.u32 %s121, 1
        %s1928 = scalar_lea.sflag [#allocation4], %s1927
        %s1929 = sand.u32 %s121, 1
        %s1930 = smul.addr %s1929, 16
        %s1931 = scalar_lea.vmem [#allocation8], %s1930
        // Predicated region
        $region45: #{tpu_custom_call.1} parent=31 // pred_check
          %p1932 = pneg %p131
        $region46: #{tpu_custom_call.1} parent=31 // pred_check_branch
          %1934 = sbr.rel (%p1932) target = $region48
        $region47: #{tpu_custom_call.1} parent=31 // pred_region
          %s1935 = smul.u32 2, %s25
          %s1936 = smul.u32 2, %s26
          %s1938 = ssub.s32 256, 256
          %1939 = vsyncadd %s1928, %s1938
          %s1940 = smul.addr %s1935, 4
          %s1941 = sadd.s32 %s1936, %s1940
          %s1942 = smul.addr %s1941, 64
          %s1943 = scalar_lea.hbm %s3, %s1942
          %s1944 = sshll.u32 %s1931, 4
          %s1945 = int_to_ptr.vmem [resolvable:$true] %s1944
          %1950 = dma.vmem_to_hbm [thread:$0]  %s1945, 256, %s1943, %s1928, 128, 256, 8
        $region48: #{tpu_custom_call.1} parent=31 // pred_fallthru
          _
      $region32: #{tpu_custom_call.1} parent=5 // pred_fallthru
        _
      %p1951 = scmp.le.s32.totalorder 2, %s16
      // Predicated region
      $region49: #{tpu_custom_call.1} parent=5 // pred_check
        %p1952 = pneg %p1951
      $region50: #{tpu_custom_call.1} parent=5 // pred_check_branch
        %1954 = sbr.rel (%p1952) target = $region52
      $region51: #{tpu_custom_call.1} parent=5 // pred_region
        %s1955 = ssub.s32 %s16, 2
        // Predicated region
        $region53: #{tpu_custom_call.1} parent=51 // pred_check
          %p1956 = pneg %p137
        $region54: #{tpu_custom_call.1} parent=51 // pred_check_branch
          %1958 = sbr.rel (%p1956) target = $region56
        $region55: #{tpu_custom_call.1} parent=51 // pred_region
          %s1959 = sand.u32 %s122, 1
          %s1960 = scalar_lea.sflag [#allocation4], %s1959
          %s1961 = sand.u32 %s122, 1
          %s1962 = smul.addr %s1961, 16
          %s1963 = scalar_lea.vmem [#allocation8], %s1962
          %1964 = dma.done %s1960, 256
        $region56: #{tpu_custom_call.1} parent=51 // pred_fallthru
          _
      $region52: #{tpu_custom_call.1} parent=5 // pred_fallthru
        _
    $region6: #{tpu_custom_call.1} parent=1 // loop_footer
      %s20 = sadd.s32 1, %s16
    $region7: #{tpu_custom_call.1} parent=1 // loop_footer_branch
      %15 = sbr.rel target = $region3
    $region8: #{tpu_custom_call.1} parent=1 // loop_exit
      _
    %1965 = vsyncpa [#allocation3], 1
    %s1966 = scalar_lea.sflag [#allocation3], 1
    %1967 = vsyncpa %s1966, 1
    %1968 = vsyncpa [#allocation6], 1
    %s1969 = scalar_lea.sflag [#allocation6], 1
    %1970 = vsyncpa %s1969, 1
    %1971 = vsyncpa [#allocation4], 1
    %s1972 = scalar_lea.sflag [#allocation4], 1
    %1973 = vsyncpa %s1972, 1

</llo_original>
